<compile_context>
chip_gen: v7x
topology: tpu7x:2x2x1
jax: 0.10.0
libtpu: 0.0.40
codegen_flags: <defaults>
</compile_context>

<pallas_src>
import math

import jax
import jax.numpy as jnp
from jax.experimental import pallas as pl
from jax.experimental.pallas import tpu as pltpu

# -------- problem sizes (scaled down from dim=2048, heads=8) --------
BATCH = 2
SEQ = 16
DIM = 128                      # embedding dim (lane-dense: multiple of 128)
HEADS = 4
DIM_HEAD = DIM // HEADS        # 32   (module: dim_head = dim // heads)
INNER = HEADS * DIM_HEAD       # 128
DIM_FF = DIM                   # module: FeedForward(dim, dim)
EPS = 1e-5


def _gelu_tanh(x):
    # TODO(synk): PyTorch nn.GELU() default is the exact erf form; the tanh
    # approximation is used here because erf has no guaranteed Mosaic
    # lowering (max deviation from exact GELU ~1e-3).
    c = math.sqrt(2.0 / math.pi)
    return 0.5 * x * (1.0 + jnp.tanh(c * (x + 0.044715 * x * x * x)))


@jax.jit
def transformer_qkv(q, k, v, params):
    """Fused PreNorm attention + FFN layer (single pallas_call, all in VMEM)."""
    B, N, D = q.shape
    H, DH = HEADS, DIM_HEAD
    BN = B * N

    # trace-time (free, exact): flatten tokens, fold attention scale into wq.
    q2 = q.reshape(BN, D)
    k2 = k.reshape(BN, D)
    v2 = v.reshape(BN, D)
    wq_scaled = params["wq"] * (float(DH) ** -0.5)

    def kernel(q_ref, k_ref, v_ref, gamma_ref, beta_ref,
               wq_ref, wk_ref, wv_ref, wout_ref, bout_ref,
               w1_ref, b1_ref, w2_ref, b2_ref, o_ref):
        gamma = gamma_ref[...]                    # (1, D)
        beta = beta_ref[...]

        # ---- shared LayerNorm (eps = 1e-5, affine), on (BN, D) tiles ----
        def layernorm(x):
            mean = jnp.mean(x, axis=-1, keepdims=True)
            xc = x - mean
            var = jnp.mean(xc * xc, axis=-1, keepdims=True)
            return xc * jax.lax.rsqrt(var + EPS) * gamma + beta

        q_raw = q_ref[...]                        # (BN, D) -- raw q for residual
        xq = layernorm(q_raw)
        xk = layernorm(k_ref[...])
        xv = layernorm(v_ref[...])

        # ---- Q/K/V projections: single lane-dense 2D matmuls, no bias ----
        # (scale DH**-0.5 pre-folded into wq by the wrapper)
        Q = jnp.dot(xq, wq_ref[...], preferred_element_type=jnp.float32)   # (BN, INNER)
        K = jnp.dot(xk, wk_ref[...], preferred_element_type=jnp.float32)
        V = jnp.dot(xv, wv_ref[...], preferred_element_type=jnp.float32)

        # ---- split heads only for the attention core: (BN, H*DH) -> (H*B, N, DH)
        # with g = h*B + b (static lane slices + leading-dim reshape/concat).
        def to_heads(t):
            return jnp.concatenate(
                [t[:, h * DH:(h + 1) * DH].reshape(B, N, DH) for h in range(H)],
                axis=0)

        q_g, k_g, v_g = to_heads(Q), to_heads(K), to_heads(V)   # (G, N, DH)

        def bmm(a, b, ca, cb):                    # batched matmul over axis 0
            return jax.lax.dot_general(
                a, b, (((ca,), (cb,)), ((0,), (0,))),
                preferred_element_type=jnp.float32)

        # ---- scaled dot-product attention (scale already in Q) ----
        dots = bmm(q_g, k_g, 2, 2)                               # (G, N, N)
        dots = dots - jnp.max(dots, axis=-1, keepdims=True)
        e = jnp.exp(dots)
        attn = e * pl.reciprocal(jnp.sum(e, axis=-1, keepdims=True), approx=True)
        out_g = bmm(attn, v_g, 2, 1)                             # (G, N, DH)

        # ---- merge heads back to lanes: (G, N, DH) -> (BN, H*DH) ----
        out_flat = jnp.concatenate(
            [out_g[h * B:(h + 1) * B].reshape(BN, DH) for h in range(H)],
            axis=-1)                                             # (BN, INNER)

        # ---- output projection (one matmul) + bias + residual (raw q) ----
        y = jnp.dot(out_flat, wout_ref[...], preferred_element_type=jnp.float32)
        attn_out = y + bout_ref[...] + q_raw                     # (BN, D)

        # ---- FeedForward: Linear -> GELU -> Linear, + residual ----
        h1 = jnp.dot(attn_out, w1_ref[...],
                     preferred_element_type=jnp.float32) + b1_ref[...]
        h1 = _gelu_tanh(h1)
        h2 = jnp.dot(h1, w2_ref[...],
                     preferred_element_type=jnp.float32) + b2_ref[...]

        o_ref[...] = (h2 + attn_out).astype(o_ref.dtype)

    vmem = pl.BlockSpec(memory_space=pltpu.MemorySpace.VMEM)
    out2 = pl.pallas_call(
        kernel,
        out_shape=jax.ShapeDtypeStruct((BN, D), q.dtype),
        in_specs=[vmem] * 14,
        out_specs=vmem,
    )(q2, k2, v2, params["gamma"], params["beta"],
      wq_scaled, params["wk"], params["wv"], params["wout"], params["bout"],
      params["w1"], params["b1"], params["w2"], params["b2"])
    return out2.reshape(B, N, D)


def transformer_qkv_ref(q, k, v, params):
    """Pure-JAX reference of Transformer_qkv (depth=1, eval mode)."""
    hp = jax.lax.Precision.HIGHEST

    def layernorm(x):
        mean = jnp.mean(x, axis=-1, keepdims=True)
        var = jnp.mean((x - mean) ** 2, axis=-1, keepdims=True)
        return ((x - mean) * jax.lax.rsqrt(var + EPS)
                * params["gamma"][0] + params["beta"][0])

    B, N, _ = q.shape
    xq, xk, xv = layernorm(q), layernorm(k), layernorm(v)
    Q = jnp.dot(xq, params["wq"], precision=hp)          # (B, N, INNER)
    K = jnp.dot(xk, params["wk"], precision=hp)
    V = jnp.dot(xv, params["wv"], precision=hp)

    def to_heads(t):                                     # (B, N, H*DH) -> (B, H, N, DH)
        return t.reshape(B, N, HEADS, DIM_HEAD).transpose(0, 2, 1, 3)

    Qh, Kh, Vh = to_heads(Q), to_heads(K), to_heads(V)
    dots = jnp.einsum("bhid,bhjd->bhij", Qh, Kh, precision=hp) * (DIM_HEAD ** -0.5)
    attn = jax.nn.softmax(dots, axis=-1)
    out = jnp.einsum("bhij,bhjd->bhid", attn, Vh, precision=hp)
    out = out.transpose(0, 2, 1, 3).reshape(B, N, INNER)
    y = jnp.dot(out, params["wout"], precision=hp) + params["bout"][0]
    x = y + q                                            # PreNormattention residual
    h = _gelu_tanh(jnp.dot(x, params["w1"], precision=hp) + params["b1"][0])
    ff = jnp.dot(h, params["w2"], precision=hp) + params["b2"][0]
    return ff + x                                        # FeedForward residual


if __name__ == "__main__":
    key = jax.random.PRNGKey(0)
    keys = jax.random.split(key, 14)

    q = jax.random.normal(keys[0], (BATCH, SEQ, DIM), dtype=jnp.float32)
    k = jax.random.normal(keys[1], (BATCH, SEQ, DIM), dtype=jnp.float32)
    v = jax.random.normal(keys[2], (BATCH, SEQ, DIM), dtype=jnp.float32)

    params = {
        "gamma": 1.0 + 0.05 * jax.random.normal(keys[3], (1, DIM), dtype=jnp.float32),
        "beta": 0.05 * jax.random.normal(keys[4], (1, DIM), dtype=jnp.float32),
        "wq": 0.02 * jax.random.normal(keys[5], (DIM, INNER), dtype=jnp.float32),
        "wk": 0.02 * jax.random.normal(keys[6], (DIM, INNER), dtype=jnp.float32),
        "wv": 0.02 * jax.random.normal(keys[7], (DIM, INNER), dtype=jnp.float32),
        "wout": 0.02 * jax.random.normal(keys[8], (INNER, DIM), dtype=jnp.float32),
        "bout": 0.02 * jax.random.normal(keys[9], (1, DIM), dtype=jnp.float32),
        "w1": 0.02 * jax.random.normal(keys[10], (DIM, DIM_FF), dtype=jnp.float32),
        "b1": 0.02 * jax.random.normal(keys[11], (1, DIM_FF), dtype=jnp.float32),
        "w2": 0.02 * jax.random.normal(keys[12], (DIM_FF, DIM), dtype=jnp.float32),
        "b2": 0.02 * jax.random.normal(keys[13], (1, DIM), dtype=jnp.float32),
    }

    out = transformer_qkv(q, k, v, params)
    out = jax.block_until_ready(out)

    ref = transformer_qkv_ref(q, k, v, params)
    assert out.shape == (BATCH, SEQ, DIM)
    max_err = float(jnp.max(jnp.abs(out - ref)))
    assert jnp.allclose(out, ref, atol=2e-3, rtol=2e-3), \
        f"mismatch vs reference (max abs err {max_err:.3e})"

    print("KERNEL_OK")
</pallas_src>

<mosaic_0001>
module attributes {stable_mosaic.version = 11 : i64} {
  func.func @kernel(%arg0: memref<32x128xf32, #tpu.memory_space<vmem>>, %arg1: memref<32x128xf32, #tpu.memory_space<vmem>>, %arg2: memref<32x128xf32, #tpu.memory_space<vmem>>, %arg3: memref<1x128xf32, #tpu.memory_space<vmem>>, %arg4: memref<1x128xf32, #tpu.memory_space<vmem>>, %arg5: memref<128x128xf32, #tpu.memory_space<vmem>>, %arg6: memref<128x128xf32, #tpu.memory_space<vmem>>, %arg7: memref<128x128xf32, #tpu.memory_space<vmem>>, %arg8: memref<128x128xf32, #tpu.memory_space<vmem>>, %arg9: memref<1x128xf32, #tpu.memory_space<vmem>>, %arg10: memref<128x128xf32, #tpu.memory_space<vmem>>, %arg11: memref<1x128xf32, #tpu.memory_space<vmem>>, %arg12: memref<128x128xf32, #tpu.memory_space<vmem>>, %arg13: memref<1x128xf32, #tpu.memory_space<vmem>>, %arg14: memref<32x128xf32, #tpu.memory_space<vmem>>) attributes {dimension_semantics = [], scalar_prefetch = 0 : i64, scratch_operands = 0 : i64, tpu.core_type = #tpu.core_type<tc>} {
    %c0 = arith.constant 0 : index
    %c0_0 = arith.constant 0 : index
    %0 = vector.load %arg3[%c0, %c0_0] : memref<1x128xf32, #tpu.memory_space<vmem>>, vector<1x128xf32>
    %c0_1 = arith.constant 0 : index
    %c0_2 = arith.constant 0 : index
    %1 = vector.load %arg4[%c0_1, %c0_2] : memref<1x128xf32, #tpu.memory_space<vmem>>, vector<1x128xf32>
    %c0_3 = arith.constant 0 : index
    %c0_4 = arith.constant 0 : index
    %2 = vector.load %arg0[%c0_3, %c0_4] : memref<32x128xf32, #tpu.memory_space<vmem>>, vector<32x128xf32>
    %cst = arith.constant dense<0.000000e+00> : vector<32xf32>
    %3 = vector.multi_reduction <add>, %2, %cst [1] : vector<32x128xf32> to vector<32xf32>
    %4 = vector.shape_cast %3 : vector<32xf32> to vector<32x1xf32>
    %cst_5 = arith.constant 1.280000e+02 : f32
    %5 = vector.broadcast %cst_5 : f32 to vector<32x1xf32>
    %6 = arith.divf %4, %5 : vector<32x1xf32>
    %7 = vector.broadcast %6 : vector<32x1xf32> to vector<32x128xf32>
    %8 = arith.subf %2, %7 : vector<32x128xf32>
    %9 = arith.mulf %8, %8 : vector<32x128xf32>
    %cst_6 = arith.constant dense<0.000000e+00> : vector<32xf32>
    %10 = vector.multi_reduction <add>, %9, %cst_6 [1] : vector<32x128xf32> to vector<32xf32>
    %11 = vector.shape_cast %10 : vector<32xf32> to vector<32x1xf32>
    %cst_7 = arith.constant 1.280000e+02 : f32
    %12 = vector.broadcast %cst_7 : f32 to vector<32x1xf32>
    %13 = arith.divf %11, %12 : vector<32x1xf32>
    %cst_8 = arith.constant 9.99999974E-6 : f32
    %14 = vector.broadcast %cst_8 : f32 to vector<32x1xf32>
    %15 = arith.addf %13, %14 : vector<32x1xf32>
    %16 = math.rsqrt %15 : vector<32x1xf32>
    %17 = vector.broadcast %16 : vector<32x1xf32> to vector<32x128xf32>
    %18 = arith.mulf %8, %17 : vector<32x128xf32>
    %19 = vector.broadcast %0 : vector<1x128xf32> to vector<32x128xf32>
    %20 = arith.mulf %18, %19 : vector<32x128xf32>
    %21 = vector.broadcast %1 : vector<1x128xf32> to vector<32x128xf32>
    %22 = arith.addf %20, %21 : vector<32x128xf32>
    %c0_9 = arith.constant 0 : index
    %c0_10 = arith.constant 0 : index
    %23 = vector.load %arg1[%c0_9, %c0_10] : memref<32x128xf32, #tpu.memory_space<vmem>>, vector<32x128xf32>
    %cst_11 = arith.constant dense<0.000000e+00> : vector<32xf32>
    %24 = vector.multi_reduction <add>, %23, %cst_11 [1] : vector<32x128xf32> to vector<32xf32>
    %25 = vector.shape_cast %24 : vector<32xf32> to vector<32x1xf32>
    %cst_12 = arith.constant 1.280000e+02 : f32
    %26 = vector.broadcast %cst_12 : f32 to vector<32x1xf32>
    %27 = arith.divf %25, %26 : vector<32x1xf32>
    %28 = vector.broadcast %27 : vector<32x1xf32> to vector<32x128xf32>
    %29 = arith.subf %23, %28 : vector<32x128xf32>
    %30 = arith.mulf %29, %29 : vector<32x128xf32>
    %cst_13 = arith.constant dense<0.000000e+00> : vector<32xf32>
    %31 = vector.multi_reduction <add>, %30, %cst_13 [1] : vector<32x128xf32> to vector<32xf32>
    %32 = vector.shape_cast %31 : vector<32xf32> to vector<32x1xf32>
    %cst_14 = arith.constant 1.280000e+02 : f32
    %33 = vector.broadcast %cst_14 : f32 to vector<32x1xf32>
    %34 = arith.divf %32, %33 : vector<32x1xf32>
    %cst_15 = arith.constant 9.99999974E-6 : f32
    %35 = vector.broadcast %cst_15 : f32 to vector<32x1xf32>
    %36 = arith.addf %34, %35 : vector<32x1xf32>
    %37 = math.rsqrt %36 : vector<32x1xf32>
    %38 = vector.broadcast %37 : vector<32x1xf32> to vector<32x128xf32>
    %39 = arith.mulf %29, %38 : vector<32x128xf32>
    %40 = vector.broadcast %0 : vector<1x128xf32> to vector<32x128xf32>
    %41 = arith.mulf %39, %40 : vector<32x128xf32>
    %42 = vector.broadcast %1 : vector<1x128xf32> to vector<32x128xf32>
    %43 = arith.addf %41, %42 : vector<32x128xf32>
    %c0_16 = arith.constant 0 : index
    %c0_17 = arith.constant 0 : index
    %44 = vector.load %arg2[%c0_16, %c0_17] : memref<32x128xf32, #tpu.memory_space<vmem>>, vector<32x128xf32>
    %cst_18 = arith.constant dense<0.000000e+00> : vector<32xf32>
    %45 = vector.multi_reduction <add>, %44, %cst_18 [1] : vector<32x128xf32> to vector<32xf32>
    %46 = vector.shape_cast %45 : vector<32xf32> to vector<32x1xf32>
    %cst_19 = arith.constant 1.280000e+02 : f32
    %47 = vector.broadcast %cst_19 : f32 to vector<32x1xf32>
    %48 = arith.divf %46, %47 : vector<32x1xf32>
    %49 = vector.broadcast %48 : vector<32x1xf32> to vector<32x128xf32>
    %50 = arith.subf %44, %49 : vector<32x128xf32>
    %51 = arith.mulf %50, %50 : vector<32x128xf32>
    %cst_20 = arith.constant dense<0.000000e+00> : vector<32xf32>
    %52 = vector.multi_reduction <add>, %51, %cst_20 [1] : vector<32x128xf32> to vector<32xf32>
    %53 = vector.shape_cast %52 : vector<32xf32> to vector<32x1xf32>
    %cst_21 = arith.constant 1.280000e+02 : f32
    %54 = vector.broadcast %cst_21 : f32 to vector<32x1xf32>
    %55 = arith.divf %53, %54 : vector<32x1xf32>
    %cst_22 = arith.constant 9.99999974E-6 : f32
    %56 = vector.broadcast %cst_22 : f32 to vector<32x1xf32>
    %57 = arith.addf %55, %56 : vector<32x1xf32>
    %58 = math.rsqrt %57 : vector<32x1xf32>
    %59 = vector.broadcast %58 : vector<32x1xf32> to vector<32x128xf32>
    %60 = arith.mulf %50, %59 : vector<32x128xf32>
    %61 = vector.broadcast %0 : vector<1x128xf32> to vector<32x128xf32>
    %62 = arith.mulf %60, %61 : vector<32x128xf32>
    %63 = vector.broadcast %1 : vector<1x128xf32> to vector<32x128xf32>
    %64 = arith.addf %62, %63 : vector<32x128xf32>
    %c0_23 = arith.constant 0 : index
    %c0_24 = arith.constant 0 : index
    %65 = vector.load %arg5[%c0_23, %c0_24] : memref<128x128xf32, #tpu.memory_space<vmem>>, vector<128x128xf32>
    %cst_25 = arith.constant dense<0.000000e+00> : vector<32x128xf32>
    %66 = tpu.matmul %22, %65, %cst_25 {dimension_numbers = #tpu.dot_dimension_numbers<[1], [0], [0], [1], [0, 0, 1, 1], [], []>} : vector<32x128xf32>, vector<128x128xf32>, vector<32x128xf32> -> vector<32x128xf32>
    %c0_26 = arith.constant 0 : index
    %c0_27 = arith.constant 0 : index
    %67 = vector.load %arg6[%c0_26, %c0_27] : memref<128x128xf32, #tpu.memory_space<vmem>>, vector<128x128xf32>
    %cst_28 = arith.constant dense<0.000000e+00> : vector<32x128xf32>
    %68 = tpu.matmul %43, %67, %cst_28 {dimension_numbers = #tpu.dot_dimension_numbers<[1], [0], [0], [1], [0, 0, 1, 1], [], []>} : vector<32x128xf32>, vector<128x128xf32>, vector<32x128xf32> -> vector<32x128xf32>
    %c0_29 = arith.constant 0 : index
    %c0_30 = arith.constant 0 : index
    %69 = vector.load %arg7[%c0_29, %c0_30] : memref<128x128xf32, #tpu.memory_space<vmem>>, vector<128x128xf32>
    %cst_31 = arith.constant dense<0.000000e+00> : vector<32x128xf32>
    %70 = tpu.matmul %64, %69, %cst_31 {dimension_numbers = #tpu.dot_dimension_numbers<[1], [0], [0], [1], [0, 0, 1, 1], [], []>} : vector<32x128xf32>, vector<128x128xf32>, vector<32x128xf32> -> vector<32x128xf32>
    %71 = vector.extract_strided_slice %66 {offsets = [0, 0], sizes = [32, 32], strides = [1, 1]} : vector<32x128xf32> to vector<32x32xf32>
    %72 = vector.shape_cast %71 : vector<32x32xf32> to vector<2x16x32xf32>
    %73 = vector.extract_strided_slice %66 {offsets = [0, 32], sizes = [32, 32], strides = [1, 1]} : vector<32x128xf32> to vector<32x32xf32>
    %74 = vector.shape_cast %73 : vector<32x32xf32> to vector<2x16x32xf32>
    %75 = vector.extract_strided_slice %66 {offsets = [0, 64], sizes = [32, 32], strides = [1, 1]} : vector<32x128xf32> to vector<32x32xf32>
    %76 = vector.shape_cast %75 : vector<32x32xf32> to vector<2x16x32xf32>
    %77 = vector.extract_strided_slice %66 {offsets = [0, 96], sizes = [32, 32], strides = [1, 1]} : vector<32x128xf32> to vector<32x32xf32>
    %78 = vector.shape_cast %77 : vector<32x32xf32> to vector<2x16x32xf32>
    %79 = tpu.concatenate %72, %74, %76, %78 in 0 : vector<2x16x32xf32>, vector<2x16x32xf32>, vector<2x16x32xf32>, vector<2x16x32xf32> -> vector<8x16x32xf32>
    %80 = vector.extract_strided_slice %68 {offsets = [0, 0], sizes = [32, 32], strides = [1, 1]} : vector<32x128xf32> to vector<32x32xf32>
    %81 = vector.shape_cast %80 : vector<32x32xf32> to vector<2x16x32xf32>
    %82 = vector.extract_strided_slice %68 {offsets = [0, 32], sizes = [32, 32], strides = [1, 1]} : vector<32x128xf32> to vector<32x32xf32>
    %83 = vector.shape_cast %82 : vector<32x32xf32> to vector<2x16x32xf32>
    %84 = vector.extract_strided_slice %68 {offsets = [0, 64], sizes = [32, 32], strides = [1, 1]} : vector<32x128xf32> to vector<32x32xf32>
    %85 = vector.shape_cast %84 : vector<32x32xf32> to vector<2x16x32xf32>
    %86 = vector.extract_strided_slice %68 {offsets = [0, 96], sizes = [32, 32], strides = [1, 1]} : vector<32x128xf32> to vector<32x32xf32>
    %87 = vector.shape_cast %86 : vector<32x32xf32> to vector<2x16x32xf32>
    %88 = tpu.concatenate %81, %83, %85, %87 in 0 : vector<2x16x32xf32>, vector<2x16x32xf32>, vector<2x16x32xf32>, vector<2x16x32xf32> -> vector<8x16x32xf32>
    %89 = vector.extract_strided_slice %70 {offsets = [0, 0], sizes = [32, 32], strides = [1, 1]} : vector<32x128xf32> to vector<32x32xf32>
    %90 = vector.shape_cast %89 : vector<32x32xf32> to vector<2x16x32xf32>
    %91 = vector.extract_strided_slice %70 {offsets = [0, 32], sizes = [32, 32], strides = [1, 1]} : vector<32x128xf32> to vector<32x32xf32>
    %92 = vector.shape_cast %91 : vector<32x32xf32> to vector<2x16x32xf32>
    %93 = vector.extract_strided_slice %70 {offsets = [0, 64], sizes = [32, 32], strides = [1, 1]} : vector<32x128xf32> to vector<32x32xf32>
    %94 = vector.shape_cast %93 : vector<32x32xf32> to vector<2x16x32xf32>
    %95 = vector.extract_strided_slice %70 {offsets = [0, 96], sizes = [32, 32], strides = [1, 1]} : vector<32x128xf32> to vector<32x32xf32>
    %96 = vector.shape_cast %95 : vector<32x32xf32> to vector<2x16x32xf32>
    %97 = tpu.concatenate %90, %92, %94, %96 in 0 : vector<2x16x32xf32>, vector<2x16x32xf32>, vector<2x16x32xf32>, vector<2x16x32xf32> -> vector<8x16x32xf32>
    %cst_32 = arith.constant dense<0.000000e+00> : vector<8x16x16xf32>
    %98 = tpu.matmul %79, %88, %cst_32 {dimension_numbers = #tpu.dot_dimension_numbers<[2], [2], [1], [1], [0, 0, 0, 1, 1, 1], [0], [0]>} : vector<8x16x32xf32>, vector<8x16x32xf32>, vector<8x16x16xf32> -> vector<8x16x16xf32>
    %cst_33 = arith.constant dense<0xFF800000> : vector<8x16xf32>
    %99 = vector.multi_reduction <maximumf>, %98, %cst_33 [2] : vector<8x16x16xf32> to vector<8x16xf32>
    %100 = vector.shape_cast %99 : vector<8x16xf32> to vector<8x16x1xf32>
    %101 = vector.broadcast %100 : vector<8x16x1xf32> to vector<8x16x16xf32>
    %102 = arith.subf %98, %101 : vector<8x16x16xf32>
    %103 = math.exp %102 : vector<8x16x16xf32>
    %cst_34 = arith.constant dense<0.000000e+00> : vector<8x16xf32>
    %104 = vector.multi_reduction <add>, %103, %cst_34 [2] : vector<8x16x16xf32> to vector<8x16xf32>
    %105 = vector.shape_cast %104 : vector<8x16xf32> to vector<8x16x1xf32>
    %106 = tpu.reciprocal %105 {approx = true} : vector<8x16x1xf32> -> vector<8x16x1xf32>
    %107 = vector.broadcast %106 : vector<8x16x1xf32> to vector<8x16x16xf32>
    %108 = arith.mulf %103, %107 : vector<8x16x16xf32>
    %cst_35 = arith.constant dense<0.000000e+00> : vector<8x16x32xf32>
    %109 = tpu.matmul %108, %97, %cst_35 {dimension_numbers = #tpu.dot_dimension_numbers<[2], [1], [1], [2], [0, 0, 0, 1, 1, 2], [0], [0]>} : vector<8x16x16xf32>, vector<8x16x32xf32>, vector<8x16x32xf32> -> vector<8x16x32xf32>
    %110 = vector.extract_strided_slice %109 {offsets = [0, 0, 0], sizes = [2, 16, 32], strides = [1, 1, 1]} : vector<8x16x32xf32> to vector<2x16x32xf32>
    %111 = vector.shape_cast %110 : vector<2x16x32xf32> to vector<32x32xf32>
    %112 = vector.extract_strided_slice %109 {offsets = [2, 0, 0], sizes = [2, 16, 32], strides = [1, 1, 1]} : vector<8x16x32xf32> to vector<2x16x32xf32>
    %113 = vector.shape_cast %112 : vector<2x16x32xf32> to vector<32x32xf32>
    %114 = vector.extract_strided_slice %109 {offsets = [4, 0, 0], sizes = [2, 16, 32], strides = [1, 1, 1]} : vector<8x16x32xf32> to vector<2x16x32xf32>
    %115 = vector.shape_cast %114 : vector<2x16x32xf32> to vector<32x32xf32>
    %116 = vector.extract_strided_slice %109 {offsets = [6, 0, 0], sizes = [2, 16, 32], strides = [1, 1, 1]} : vector<8x16x32xf32> to vector<2x16x32xf32>
    %117 = vector.shape_cast %116 : vector<2x16x32xf32> to vector<32x32xf32>
    %118 = tpu.concatenate %111, %113, %115, %117 in 1 : vector<32x32xf32>, vector<32x32xf32>, vector<32x32xf32>, vector<32x32xf32> -> vector<32x128xf32>
    %c0_36 = arith.constant 0 : index
    %c0_37 = arith.constant 0 : index
    %119 = vector.load %arg8[%c0_36, %c0_37] : memref<128x128xf32, #tpu.memory_space<vmem>>, vector<128x128xf32>
    %cst_38 = arith.constant dense<0.000000e+00> : vector<32x128xf32>
    %120 = tpu.matmul %118, %119, %cst_38 {dimension_numbers = #tpu.dot_dimension_numbers<[1], [0], [0], [1], [0, 0, 1, 1], [], []>} : vector<32x128xf32>, vector<128x128xf32>, vector<32x128xf32> -> vector<32x128xf32>
    %c0_39 = arith.constant 0 : index
    %c0_40 = arith.constant 0 : index
    %121 = vector.load %arg9[%c0_39, %c0_40] : memref<1x128xf32, #tpu.memory_space<vmem>>, vector<1x128xf32>
    %122 = vector.broadcast %121 : vector<1x128xf32> to vector<32x128xf32>
    %123 = arith.addf %120, %122 : vector<32x128xf32>
    %124 = arith.addf %123, %2 : vector<32x128xf32>
    %c0_41 = arith.constant 0 : index
    %c0_42 = arith.constant 0 : index
    %125 = vector.load %arg10[%c0_41, %c0_42] : memref<128x128xf32, #tpu.memory_space<vmem>>, vector<128x128xf32>
    %cst_43 = arith.constant dense<0.000000e+00> : vector<32x128xf32>
    %126 = tpu.matmul %124, %125, %cst_43 {dimension_numbers = #tpu.dot_dimension_numbers<[1], [0], [0], [1], [0, 0, 1, 1], [], []>} : vector<32x128xf32>, vector<128x128xf32>, vector<32x128xf32> -> vector<32x128xf32>
    %c0_44 = arith.constant 0 : index
    %c0_45 = arith.constant 0 : index
    %127 = vector.load %arg11[%c0_44, %c0_45] : memref<1x128xf32, #tpu.memory_space<vmem>>, vector<1x128xf32>
    %128 = vector.broadcast %127 : vector<1x128xf32> to vector<32x128xf32>
    %129 = arith.addf %126, %128 : vector<32x128xf32>
    %cst_46 = arith.constant 5.000000e-01 : f32
    %130 = vector.broadcast %cst_46 : f32 to vector<32x128xf32>
    %131 = arith.mulf %130, %129 : vector<32x128xf32>
    %cst_47 = arith.constant 4.471500e-02 : f32
    %132 = vector.broadcast %cst_47 : f32 to vector<32x128xf32>
    %133 = arith.mulf %132, %129 : vector<32x128xf32>
    %134 = arith.mulf %133, %129 : vector<32x128xf32>
    %135 = arith.mulf %134, %129 : vector<32x128xf32>
    %136 = arith.addf %129, %135 : vector<32x128xf32>
    %cst_48 = arith.constant 0.797884583 : f32
    %137 = vector.broadcast %cst_48 : f32 to vector<32x128xf32>
    %138 = arith.mulf %137, %136 : vector<32x128xf32>
    %139 = math.tanh %138 : vector<32x128xf32>
    %cst_49 = arith.constant 1.000000e+00 : f32
    %140 = vector.broadcast %cst_49 : f32 to vector<32x128xf32>
    %141 = arith.addf %140, %139 : vector<32x128xf32>
    %142 = arith.mulf %131, %141 : vector<32x128xf32>
    %c0_50 = arith.constant 0 : index
    %c0_51 = arith.constant 0 : index
    %143 = vector.load %arg12[%c0_50, %c0_51] : memref<128x128xf32, #tpu.memory_space<vmem>>, vector<128x128xf32>
    %cst_52 = arith.constant dense<0.000000e+00> : vector<32x128xf32>
    %144 = tpu.matmul %142, %143, %cst_52 {dimension_numbers = #tpu.dot_dimension_numbers<[1], [0], [0], [1], [0, 0, 1, 1], [], []>} : vector<32x128xf32>, vector<128x128xf32>, vector<32x128xf32> -> vector<32x128xf32>
    %c0_53 = arith.constant 0 : index
    %c0_54 = arith.constant 0 : index
    %145 = vector.load %arg13[%c0_53, %c0_54] : memref<1x128xf32, #tpu.memory_space<vmem>>, vector<1x128xf32>
    %146 = vector.broadcast %145 : vector<1x128xf32> to vector<32x128xf32>
    %147 = arith.addf %144, %146 : vector<32x128xf32>
    %148 = arith.addf %147, %124 : vector<32x128xf32>
    %c0_55 = arith.constant 0 : index
    %c0_56 = arith.constant 0 : index
    %149 = vector.load %arg14[%c0_55, %c0_56] : memref<32x128xf32, #tpu.memory_space<vmem>>, vector<32x128xf32>
    tpu.vector_store %arg14[%c0_55, %c0_56], %148 {strides = array<i32>} : memref<32x128xf32, #tpu.memory_space<vmem>>, vector<32x128xf32>,
    return
  }
}

</mosaic_0001>

<llo_original>
// kernel: transformer_qkv.1
$region0: #{transformer_qkv.1}
  #allocation0 [shape = 'u32[]', space=smem, size = 0x4, offset = 0x4, fixed_abs, tag = 'smem constant byte address 0x4 - core index']
  #allocation1 [shape = 'u32[144,128]{1,0:T(1,128)}', space=vmem, size = 0x12000, scoped, tag = 'internal scratch']
  %s0 = inlined_call_operand.hbm [shape: f32[32,128], index: 0, kind: input, shape index: {}]
  %s1 = inlined_call_operand.hbm [shape: f32[32,128], index: 1, kind: input, shape index: {}]
  %s2 = inlined_call_operand.hbm [shape: f32[32,128], index: 2, kind: input, shape index: {}]
  %s3 = inlined_call_operand.vmem [shape: f32[1,128], index: 3, kind: input, shape index: {}]
  %s4 = inlined_call_operand.vmem [shape: f32[1,128], index: 4, kind: input, shape index: {}]
  %s5 = inlined_call_operand.vmem [shape: f32[128,128], index: 5, kind: input, shape index: {}]
  %s6 = inlined_call_operand.vmem [shape: f32[128,128], index: 6, kind: input, shape index: {}]
  %s7 = inlined_call_operand.vmem [shape: f32[128,128], index: 7, kind: input, shape index: {}]
  %s8 = inlined_call_operand.hbm [shape: f32[128,128], index: 8, kind: input, shape index: {}]
  %s9 = inlined_call_operand.vmem [shape: f32[1,128], index: 9, kind: input, shape index: {}]
  %s10 = inlined_call_operand.hbm [shape: f32[128,128], index: 10, kind: input, shape index: {}]
  %s11 = inlined_call_operand.vmem [shape: f32[1,128], index: 11, kind: input, shape index: {}]
  %s12 = inlined_call_operand.hbm [shape: f32[128,128], index: 12, kind: input, shape index: {}]
  %s13 = inlined_call_operand.vmem [shape: f32[1,128], index: 13, kind: input, shape index: {}]
  %s14 = inlined_call_operand.hbm [shape: f32[32,128], index: 14, kind: output, shape index: {}]
  %s15 = sld [smem:[#allocation0]]
  $region90: #{transformer_qkv.1} parent=0
    _
  %s17 = ssub.s32 1, %s15
  %s18 = scalar_select 0, %s17, %s15
  $region1: #{transformer_qkv.1} parent=0
    #allocation2 [shape = 'u8[16384]{0}', space=vmem, size = 0x4000, scoped, tag = 'input window, operand 0, single buffered']
    #allocation3 [shape = 's32[1]{0}', space=sflag, size = 0x4, scoped, tag = 'scoped memory for transformer_qkv.1']
    #allocation4 [shape = 's32[1]{0}', space=sflag, size = 0x4, scoped, tag = 'scoped memory for transformer_qkv.1']
    #allocation5 [shape = 'u8[16384]{0}', space=vmem, size = 0x4000, scoped, tag = 'input window, operand 1, single buffered']
    #allocation6 [shape = 's32[1]{0}', space=sflag, size = 0x4, scoped, tag = 'scoped memory for transformer_qkv.1']
    #allocation7 [shape = 'u8[16384]{0}', space=vmem, size = 0x4000, scoped, tag = 'input window, operand 2, single buffered']
    #allocation8 [shape = 'u8[65536]{0}', space=vmem, size = 0x10000, scoped, tag = 'input window, operand 8, single buffered']
    #allocation9 [shape = 's32[1]{0}', space=sflag, size = 0x4, scoped, tag = 'scoped memory for transformer_qkv.1']
    #allocation10 [shape = 'u8[65536]{0}', space=vmem, size = 0x10000, scoped, tag = 'input window, operand 10, single buffered']
    #allocation11 [shape = 'u8[65536]{0}', space=vmem, size = 0x10000, scoped, tag = 'input window, operand 12, single buffered']
    #allocation12 [shape = 's32[1]{0}', space=sflag, size = 0x4, scoped, tag = 'scoped memory for transformer_qkv.1']
    #allocation13 [shape = 'u8[16384]{0}', space=vmem, size = 0x4000, scoped, tag = 'output window, operand 0, single buffered']
    %19 = vsyncpa [#allocation3], 0
    %20 = vsyncpa [#allocation6], 0
    %21 = vsyncpa [#allocation9], 0
    %22 = vsyncpa [#allocation12], 0
    %23 = vsyncpa [#allocation4], 0
    // Predicated region
    $region2: #{transformer_qkv.1} parent=1 // pred_check
      _
    $region3: #{transformer_qkv.1} parent=1 // pred_check_branch
      %25 = sbr.rel (0) target = $region5
    $region4: #{transformer_qkv.1} parent=1 // pred_region
      %s27 = ssub.s32 512, 512
      %28 = vsyncadd [#allocation3], %s27
      %s29 = sshll.u32 [#allocation2], 4
      %s30 = int_to_ptr.vmem [resolvable:$true] %s29
      %35 = dma.hbm_to_vmem [thread:$0]  %s0, 512, %s30, [#allocation3], 128, 128, 8
    $region5: #{transformer_qkv.1} parent=1 // pred_fallthru
      _
    // Predicated region
    $region6: #{transformer_qkv.1} parent=1 // pred_check
      _
    $region7: #{transformer_qkv.1} parent=1 // pred_check_branch
      %37 = sbr.rel (0) target = $region9
    $region8: #{transformer_qkv.1} parent=1 // pred_region
      %s39 = ssub.s32 512, 512
      %40 = vsyncadd [#allocation6], %s39
      %s41 = sshll.u32 [#allocation5], 4
      %s42 = int_to_ptr.vmem [resolvable:$true] %s41
      %47 = dma.hbm_to_vmem [thread:$0]  %s1, 512, %s42, [#allocation6], 128, 128, 8
    $region9: #{transformer_qkv.1} parent=1 // pred_fallthru
      _
    // Predicated region
    $region10: #{transformer_qkv.1} parent=1 // pred_check
      _
    $region11: #{transformer_qkv.1} parent=1 // pred_check_branch
      %49 = sbr.rel (0) target = $region13
    $region12: #{transformer_qkv.1} parent=1 // pred_region
      %s51 = ssub.s32 512, 512
      %52 = vsyncadd [#allocation6], %s51
      %s53 = sshll.u32 [#allocation7], 4
      %s54 = int_to_ptr.vmem [resolvable:$true] %s53
      %59 = dma.hbm_to_vmem [thread:$0]  %s2, 512, %s54, [#allocation6], 128, 128, 8
    $region13: #{transformer_qkv.1} parent=1 // pred_fallthru
      _
    // Predicated region
    $region14: #{transformer_qkv.1} parent=1 // pred_check
      _
    $region15: #{transformer_qkv.1} parent=1 // pred_check_branch
      %61 = sbr.rel (0) target = $region17
    $region16: #{transformer_qkv.1} parent=1 // pred_region
      _
    $region17: #{transformer_qkv.1} parent=1 // pred_fallthru
      _
    // Predicated region
    $region18: #{transformer_qkv.1} parent=1 // pred_check
      _
    $region19: #{transformer_qkv.1} parent=1 // pred_check_branch
      %63 = sbr.rel (0) target = $region21
    $region20: #{transformer_qkv.1} parent=1 // pred_region
      _
    $region21: #{transformer_qkv.1} parent=1 // pred_fallthru
      _
    // Predicated region
    $region22: #{transformer_qkv.1} parent=1 // pred_check
      _
    $region23: #{transformer_qkv.1} parent=1 // pred_check_branch
      %65 = sbr.rel (0) target = $region25
    $region24: #{transformer_qkv.1} parent=1 // pred_region
      _
    $region25: #{transformer_qkv.1} parent=1 // pred_fallthru
      _
    // Predicated region
    $region26: #{transformer_qkv.1} parent=1 // pred_check
      _
    $region27: #{transformer_qkv.1} parent=1 // pred_check_branch
      %67 = sbr.rel (0) target = $region29
    $region28: #{transformer_qkv.1} parent=1 // pred_region
      _
    $region29: #{transformer_qkv.1} parent=1 // pred_fallthru
      _
    // Predicated region
    $region30: #{transformer_qkv.1} parent=1 // pred_check
      _
    $region31: #{transformer_qkv.1} parent=1 // pred_check_branch
      %69 = sbr.rel (0) target = $region33
    $region32: #{transformer_qkv.1} parent=1 // pred_region
      _
    $region33: #{transformer_qkv.1} parent=1 // pred_fallthru
      _
    // Predicated region
    $region34: #{transformer_qkv.1} parent=1 // pred_check
      _
    $region35: #{transformer_qkv.1} parent=1 // pred_check_branch
      %71 = sbr.rel (0) target = $region37
    $region36: #{transformer_qkv.1} parent=1 // pred_region
      %s73 = ssub.s32 2048, 2048
      %74 = vsyncadd [#allocation9], %s73
      %s75 = sshll.u32 [#allocation8], 4
      %s76 = int_to_ptr.vmem [resolvable:$true] %s75
      %81 = dma.hbm_to_vmem [thread:$0]  %s8, 2048, %s76, [#allocation9], 128, 128, 8
    $region37: #{transformer_qkv.1} parent=1 // pred_fallthru
      _
    // Predicated region
    $region38: #{transformer_qkv.1} parent=1 // pred_check
      _
    $region39: #{transformer_qkv.1} parent=1 // pred_check_branch
      %83 = sbr.rel (0) target = $region41
    $region40: #{transformer_qkv.1} parent=1 // pred_region
      _
    $region41: #{transformer_qkv.1} parent=1 // pred_fallthru
      _
    // Predicated region
    $region42: #{transformer_qkv.1} parent=1 // pred_check
      _
    $region43: #{transformer_qkv.1} parent=1 // pred_check_branch
      %85 = sbr.rel (0) target = $region45
    $region44: #{transformer_qkv.1} parent=1 // pred_region
      %s87 = ssub.s32 2048, 2048
      %88 = vsyncadd [#allocation9], %s87
      %s89 = sshll.u32 [#allocation10], 4
      %s90 = int_to_ptr.vmem [resolvable:$true] %s89
      %95 = dma.hbm_to_vmem [thread:$0]  %s10, 2048, %s90, [#allocation9], 128, 128, 8
    $region45: #{transformer_qkv.1} parent=1 // pred_fallthru
      _
    // Predicated region
    $region46: #{transformer_qkv.1} parent=1 // pred_check
      _
    $region47: #{transformer_qkv.1} parent=1 // pred_check_branch
      %97 = sbr.rel (0) target = $region49
    $region48: #{transformer_qkv.1} parent=1 // pred_region
      _
    $region49: #{transformer_qkv.1} parent=1 // pred_fallthru
      _
    // Predicated region
    $region50: #{transformer_qkv.1} parent=1 // pred_check
      _
    $region51: #{transformer_qkv.1} parent=1 // pred_check_branch
      %99 = sbr.rel (0) target = $region53
    $region52: #{transformer_qkv.1} parent=1 // pred_region
      %s101 = ssub.s32 2048, 2048
      %102 = vsyncadd [#allocation12], %s101
      %s103 = sshll.u32 [#allocation11], 4
      %s104 = int_to_ptr.vmem [resolvable:$true] %s103
      %109 = dma.hbm_to_vmem [thread:$0]  %s12, 2048, %s104, [#allocation12], 128, 128, 8
    $region53: #{transformer_qkv.1} parent=1 // pred_fallthru
      _
    // Predicated region
    $region54: #{transformer_qkv.1} parent=1 // pred_check
      _
    $region55: #{transformer_qkv.1} parent=1 // pred_check_branch
      %111 = sbr.rel (0) target = $region57
    $region56: #{transformer_qkv.1} parent=1 // pred_region
      _
    $region57: #{transformer_qkv.1} parent=1 // pred_fallthru
      _
    // Predicated region
    $region58: #{transformer_qkv.1} parent=1 // pred_check
      _
    $region59: #{transformer_qkv.1} parent=1 // pred_check_branch
      %113 = sbr.rel (0) target = $region61
    $region60: #{transformer_qkv.1} parent=1 // pred_region
      %114 = dma.done [#allocation3], 512
    $region61: #{transformer_qkv.1} parent=1 // pred_fallthru
      _
    // Predicated region
    $region62: #{transformer_qkv.1} parent=1 // pred_check
      _
    $region63: #{transformer_qkv.1} parent=1 // pred_check_branch
      %116 = sbr.rel (0) target = $region65
    $region64: #{transformer_qkv.1} parent=1 // pred_region
      %117 = dma.done [#allocation6], 512
    $region65: #{transformer_qkv.1} parent=1 // pred_fallthru
      _
    // Predicated region
    $region66: #{transformer_qkv.1} parent=1 // pred_check
      _
    $region67: #{transformer_qkv.1} parent=1 // pred_check_branch
      %119 = sbr.rel (0) target = $region69
    $region68: #{transformer_qkv.1} parent=1 // pred_region
      %120 = dma.done [#allocation6], 512
    $region69: #{transformer_qkv.1} parent=1 // pred_fallthru
      _
    // Predicated region
    $region70: #{transformer_qkv.1} parent=1 // pred_check
      _
    $region71: #{transformer_qkv.1} parent=1 // pred_check_branch
      %122 = sbr.rel (0) target = $region73
    $region72: #{transformer_qkv.1} parent=1 // pred_region
      %123 = dma.done [#allocation9], 2048
    $region73: #{transformer_qkv.1} parent=1 // pred_fallthru
      _
    // Predicated region
    $region74: #{transformer_qkv.1} parent=1 // pred_check
      _
    $region75: #{transformer_qkv.1} parent=1 // pred_check_branch
      %125 = sbr.rel (0) target = $region77
    $region76: #{transformer_qkv.1} parent=1 // pred_region
      %126 = dma.done [#allocation9], 2048
    $region77: #{transformer_qkv.1} parent=1 // pred_fallthru
      _
    // Predicated region
    $region78: #{transformer_qkv.1} parent=1 // pred_check
      _
    $region79: #{transformer_qkv.1} parent=1 // pred_check_branch
      %128 = sbr.rel (0) target = $region81
    $region80: #{transformer_qkv.1} parent=1 // pred_region
      %129 = dma.done [#allocation12], 2048
    $region81: #{transformer_qkv.1} parent=1 // pred_fallthru
      _
    %v130 = vld [vmem:[%s3] sm:$0x1]
    %v131 = vld [vmem:[%s4] sm:$0x1]
    %v132 = vld [vmem:[#allocation2] sm:$0xff]
    %v133 = vld [vmem:[#allocation2 + $0x8] sm:$0xff]
    %v134 = vld [vmem:[#allocation2 + $0x10] sm:$0xff]
    %v135 = vld [vmem:[#allocation2 + $0x18] sm:$0xff]
    %136 = vadd.xlane.f32.xlu0 %v132
    %v137 = vpop.xlane.xlu0 %136
    %138 = vadd.xlane.f32.xlu0 %v133
    %v139 = vpop.xlane.xlu0 %138
    %140 = vadd.xlane.f32.xlu0 %v134
    %v141 = vpop.xlane.xlu0 %140
    %142 = vadd.xlane.f32.xlu0 %v135
    %v143 = vpop.xlane.xlu0 %142
    %v144 = vrcp.pop 128.0
    %v145 = vmul.f32 %v137, %v144
    %v146 = vmul.f32 %v139, %v144
    %v147 = vmul.f32 %v141, %v144
    %v148 = vmul.f32 %v143, %v144
    %v149 = vsub.f32 %v132, %v145
    %v150 = vsub.f32 %v133, %v146
    %v151 = vsub.f32 %v134, %v147
    %v152 = vsub.f32 %v135, %v148
    %v153 = vmul.f32 %v149, %v149
    %v154 = vmul.f32 %v150, %v150
    %v155 = vmul.f32 %v151, %v151
    %v156 = vmul.f32 %v152, %v152
    %157 = vadd.xlane.f32.xlu0 %v153
    %v158 = vpop.xlane.xlu0 %157
    %159 = vadd.xlane.f32.xlu0 %v154
    %v160 = vpop.xlane.xlu0 %159
    %161 = vadd.xlane.f32.xlu0 %v155
    %v162 = vpop.xlane.xlu0 %161
    %163 = vadd.xlane.f32.xlu0 %v156
    %v164 = vpop.xlane.xlu0 %163
    %v165 = vmul.f32 %v158, %v144
    %v166 = vmul.f32 %v160, %v144
    %v167 = vmul.f32 %v162, %v144
    %v168 = vmul.f32 %v164, %v144
    %v169 = vadd.f32 %v165, 1e-05
    %v170 = vadd.f32 %v166, 1e-05
    %v171 = vadd.f32 %v167, 1e-05
    %v172 = vadd.f32 %v168, 1e-05
    %v173 = vrsqrt.pop %v169
    %v174 = vrsqrt.pop %v170
    %v175 = vrsqrt.pop %v171
    %v176 = vrsqrt.pop %v172
    %v177 = vmul.f32 %v149, %v173
    %v178 = vmul.f32 %v150, %v174
    %v179 = vmul.f32 %v151, %v175
    %v180 = vmul.f32 %v152, %v176
    %v182 = vlaneseq
    %v183 = vshrl.u32 %v182, 7
    %v184 = vsub.s32 0, %v183
    %v185 = vrot.slane %v130, %v184
    %v187 = vmul.f32 %v177, %v185
    %v188 = vmul.f32 %v178, %v185
    %v189 = vmul.f32 %v179, %v185
    %v190 = vmul.f32 %v180, %v185
    %v192 = vlaneseq
    %v193 = vshrl.u32 %v192, 7
    %v194 = vsub.s32 0, %v193
    %v195 = vrot.slane %v131, %v194
    %v197 = vadd.f32 %v187, %v195
    %v198 = vadd.f32 %v188, %v195
    %v199 = vadd.f32 %v189, %v195
    %v200 = vadd.f32 %v190, %v195
    %v201 = vld [vmem:[#allocation5] sm:$0xff]
    %v202 = vld [vmem:[#allocation5 + $0x8] sm:$0xff]
    %v203 = vld [vmem:[#allocation5 + $0x10] sm:$0xff]
    %v204 = vld [vmem:[#allocation5 + $0x18] sm:$0xff]
    %205 = vadd.xlane.f32.xlu0 %v201
    %v206 = vpop.xlane.xlu0 %205
    %207 = vadd.xlane.f32.xlu0 %v202
    %v208 = vpop.xlane.xlu0 %207
    %209 = vadd.xlane.f32.xlu0 %v203
    %v210 = vpop.xlane.xlu0 %209
    %211 = vadd.xlane.f32.xlu0 %v204
    %v212 = vpop.xlane.xlu0 %211
    %v213 = vmul.f32 %v206, %v144
    %v214 = vmul.f32 %v208, %v144
    %v215 = vmul.f32 %v210, %v144
    %v216 = vmul.f32 %v212, %v144
    %v217 = vsub.f32 %v201, %v213
    %v218 = vsub.f32 %v202, %v214
    %v219 = vsub.f32 %v203, %v215
    %v220 = vsub.f32 %v204, %v216
    %v221 = vmul.f32 %v217, %v217
    %v222 = vmul.f32 %v218, %v218
    %v223 = vmul.f32 %v219, %v219
    %v224 = vmul.f32 %v220, %v220
    %225 = vadd.xlane.f32.xlu0 %v221
    %v226 = vpop.xlane.xlu0 %225
    %227 = vadd.xlane.f32.xlu0 %v222
    %v228 = vpop.xlane.xlu0 %227
    %229 = vadd.xlane.f32.xlu0 %v223
    %v230 = vpop.xlane.xlu0 %229
    %231 = vadd.xlane.f32.xlu0 %v224
    %v232 = vpop.xlane.xlu0 %231
    %v233 = vmul.f32 %v226, %v144
    %v234 = vmul.f32 %v228, %v144
    %v235 = vmul.f32 %v230, %v144
    %v236 = vmul.f32 %v232, %v144
    %v237 = vadd.f32 %v233, 1e-05
    %v238 = vadd.f32 %v234, 1e-05
    %v239 = vadd.f32 %v235, 1e-05
    %v240 = vadd.f32 %v236, 1e-05
    %v241 = vrsqrt.pop %v237
    %v242 = vrsqrt.pop %v238
    %v243 = vrsqrt.pop %v239
    %v244 = vrsqrt.pop %v240
    %v245 = vmul.f32 %v217, %v241
    %v246 = vmul.f32 %v218, %v242
    %v247 = vmul.f32 %v219, %v243
    %v248 = vmul.f32 %v220, %v244
    %v249 = vmul.f32 %v245, %v185
    %v250 = vmul.f32 %v246, %v185
    %v251 = vmul.f32 %v247, %v185
    %v252 = vmul.f32 %v248, %v185
    %v253 = vadd.f32 %v249, %v195
    %v254 = vadd.f32 %v250, %v195
    %v255 = vadd.f32 %v251, %v195
    %v256 = vadd.f32 %v252, %v195
    %v257 = vld [vmem:[#allocation7] sm:$0xff]
    %v258 = vld [vmem:[#allocation7 + $0x8] sm:$0xff]
    %v259 = vld [vmem:[#allocation7 + $0x10] sm:$0xff]
    %v260 = vld [vmem:[#allocation7 + $0x18] sm:$0xff]
    %261 = vadd.xlane.f32.xlu0 %v257
    %v262 = vpop.xlane.xlu0 %261
    %263 = vadd.xlane.f32.xlu0 %v258
    %v264 = vpop.xlane.xlu0 %263
    %265 = vadd.xlane.f32.xlu0 %v259
    %v266 = vpop.xlane.xlu0 %265
    %267 = vadd.xlane.f32.xlu0 %v260
    %v268 = vpop.xlane.xlu0 %267
    %v269 = vmul.f32 %v262, %v144
    %v270 = vmul.f32 %v264, %v144
    %v271 = vmul.f32 %v266, %v144
    %v272 = vmul.f32 %v268, %v144
    %v273 = vsub.f32 %v257, %v269
    %v274 = vsub.f32 %v258, %v270
    %v275 = vsub.f32 %v259, %v271
    %v276 = vsub.f32 %v260, %v272
    %v277 = vmul.f32 %v273, %v273
    %v278 = vmul.f32 %v274, %v274
    %v279 = vmul.f32 %v275, %v275
    %v280 = vmul.f32 %v276, %v276
    %281 = vadd.xlane.f32.xlu0 %v277
    %v282 = vpop.xlane.xlu0 %281
    %283 = vadd.xlane.f32.xlu0 %v278
    %v284 = vpop.xlane.xlu0 %283
    %285 = vadd.xlane.f32.xlu0 %v279
    %v286 = vpop.xlane.xlu0 %285
    %287 = vadd.xlane.f32.xlu0 %v280
    %v288 = vpop.xlane.xlu0 %287
    %v289 = vmul.f32 %v282, %v144
    %v290 = vmul.f32 %v284, %v144
    %v291 = vmul.f32 %v286, %v144
    %v292 = vmul.f32 %v288, %v144
    %v293 = vadd.f32 %v289, 1e-05
    %v294 = vadd.f32 %v290, 1e-05
    %v295 = vadd.f32 %v291, 1e-05
    %v296 = vadd.f32 %v292, 1e-05
    %v297 = vrsqrt.pop %v293
    %v298 = vrsqrt.pop %v294
    %v299 = vrsqrt.pop %v295
    %v300 = vrsqrt.pop %v296
    %v301 = vmul.f32 %v273, %v297
    %v302 = vmul.f32 %v274, %v298
    %v303 = vmul.f32 %v275, %v299
    %v304 = vmul.f32 %v276, %v300
    %v305 = vmul.f32 %v301, %v185
    %v306 = vmul.f32 %v302, %v185
    %v307 = vmul.f32 %v303, %v185
    %v308 = vmul.f32 %v304, %v185
    %v309 = vadd.f32 %v305, %v195
    %v310 = vadd.f32 %v306, %v195
    %v311 = vadd.f32 %v307, %v195
    %v312 = vadd.f32 %v308, %v195
    %v313 = vld [vmem:[%s5] sm:$0xff]
    %v314 = vld [vmem:[%s5 + $0x8] sm:$0xff]
    %v315 = vld [vmem:[%s5 + $0x10] sm:$0xff]
    %v316 = vld [vmem:[%s5 + $0x18] sm:$0xff]
    %v317 = vld [vmem:[%s5 + $0x20] sm:$0xff]
    %v318 = vld [vmem:[%s5 + $0x28] sm:$0xff]
    %v319 = vld [vmem:[%s5 + $0x30] sm:$0xff]
    %v320 = vld [vmem:[%s5 + $0x38] sm:$0xff]
    %v321 = vld [vmem:[%s5 + $0x40] sm:$0xff]
    %v322 = vld [vmem:[%s5 + $0x48] sm:$0xff]
    %v323 = vld [vmem:[%s5 + $0x50] sm:$0xff]
    %v324 = vld [vmem:[%s5 + $0x58] sm:$0xff]
    %v325 = vld [vmem:[%s5 + $0x60] sm:$0xff]
    %v326 = vld [vmem:[%s5 + $0x68] sm:$0xff]
    %v327 = vld [vmem:[%s5 + $0x70] sm:$0xff]
    %v328 = vld [vmem:[%s5 + $0x78] sm:$0xff]
    %329 = vmatprep.subr.mxu0 0.0
    %330 = vmatpush1.msra.mxu0 %v313
    %331 = vmatprep.subr.mxu0 0.0
    %332 = vmatpush1.msra.mxu0 %v314
    %333 = vmatprep.subr.mxu0 0.0
    %334 = vmatpush1.msra.mxu0 %v315
    %335 = vmatprep.subr.mxu0 0.0
    %336 = vmatpush1.msra.mxu0 %v316
    %337 = vmatprep.subr.mxu0 0.0
    %338 = vmatpush1.msra.mxu0 %v317
    %339 = vmatprep.subr.mxu0 0.0
    %340 = vmatpush1.msra.mxu0 %v318
    %341 = vmatprep.subr.mxu0 0.0
    %342 = vmatpush1.msra.mxu0 %v319
    %343 = vmatprep.subr.mxu0 0.0
    %344 = vmatpush1.msra.mxu0 %v320
    %345 = vmatprep.subr.mxu0 0.0
    %346 = vmatpush1.msra.mxu0 %v321
    %347 = vmatprep.subr.mxu0 0.0
    %348 = vmatpush1.msra.mxu0 %v322
    %349 = vmatprep.subr.mxu0 0.0
    %350 = vmatpush1.msra.mxu0 %v323
    %351 = vmatprep.subr.mxu0 0.0
    %352 = vmatpush1.msra.mxu0 %v324
    %353 = vmatprep.subr.mxu0 0.0
    %354 = vmatpush1.msra.mxu0 %v325
    %355 = vmatprep.subr.mxu0 0.0
    %356 = vmatpush1.msra.mxu0 %v326
    %357 = vmatprep.subr.mxu0 0.0
    %358 = vmatpush1.msra.mxu0 %v327
    %359 = vmatprep.subr.mxu0 0.0
    %360 = vmatpush1.msra.mxu0 %v328
    %361 = vmatprep.subr.mxu0 0.0
    %362 = vmatpush1.msra.mxu0 0.0
    %363 = vmatprep.subr.mxu0 0.0
    %364 = vmatpush1.msra.mxu0 0.0
    %365 = vmatprep.subr.mxu0 0.0
    %366 = vmatpush1.msra.mxu0 0.0
    %367 = vmatprep.subr.mxu0 0.0
    %368 = vmatpush1.msra.mxu0 0.0
    %369 = vmatprep.subr.mxu0 0.0
    %370 = vmatpush1.msra.mxu0 0.0
    %371 = vmatprep.subr.mxu0 0.0
    %372 = vmatpush1.msra.mxu0 0.0
    %373 = vmatprep.subr.mxu0 0.0
    %374 = vmatpush1.msra.mxu0 0.0
    %375 = vmatprep.subr.mxu0 0.0
    %376 = vmatpush1.msra.mxu0 0.0
    %377 = vmatprep.subr.mxu0 0.0
    %378 = vmatpush1.msra.mxu0 0.0
    %379 = vmatprep.subr.mxu0 0.0
    %380 = vmatpush1.msra.mxu0 0.0
    %381 = vmatprep.subr.mxu0 0.0
    %382 = vmatpush1.msra.mxu0 0.0
    %383 = vmatprep.subr.mxu0 0.0
    %384 = vmatpush1.msra.mxu0 0.0
    %385 = vmatprep.subr.mxu0 0.0
    %386 = vmatpush1.msra.mxu0 0.0
    %387 = vmatprep.subr.mxu0 0.0
    %388 = vmatpush1.msra.mxu0 0.0
    %389 = vmatprep.subr.mxu0 0.0
    %390 = vmatpush1.msra.mxu0 0.0
    %391 = vmatprep.subr.mxu0 0.0
    %392 = vmatpush1.msra.mxu0 0.0
    %393 = vmatprep.mubr.f32.mxu0 0.0
    %394 = vmatmul.mubr.f32.gmra.mrb[0].mxu0 %v197
    %v395 = vpop.f32.mrb[0].mxu0
    %v396 = vadd.f32 0.0, %v395
    %v397 = vpop.f32.mrb[0].mxu0
    %398 = vmatprep.mubr.f32.mxu0 0.0
    %399 = vmatmul.mubr.f32.gmra.mrb[0].mxu0 %v198
    %v400 = vpop.f32.mrb[0].mxu0
    %v401 = vadd.f32 0.0, %v400
    %v402 = vpop.f32.mrb[0].mxu0
    %403 = vmatprep.mubr.f32.mxu0 0.0
    %404 = vmatmul.mubr.f32.gmra.mrb[0].mxu0 %v199
    %v405 = vpop.f32.mrb[0].mxu0
    %v406 = vadd.f32 0.0, %v405
    %v407 = vpop.f32.mrb[0].mxu0
    %408 = vmatprep.mubr.f32.mxu0 0.0
    %409 = vmatmul.mubr.f32.gmra.mrb[0].mxu0 %v200
    %v410 = vpop.f32.mrb[0].mxu0
    %v411 = vadd.f32 0.0, %v410
    %v412 = vpop.f32.mrb[0].mxu0
    %413 = vdwg.mxu0
    %v414 = vld [vmem:[%s6] sm:$0xff]
    %v415 = vld [vmem:[%s6 + $0x8] sm:$0xff]
    %v416 = vld [vmem:[%s6 + $0x10] sm:$0xff]
    %v417 = vld [vmem:[%s6 + $0x18] sm:$0xff]
    %v418 = vld [vmem:[%s6 + $0x20] sm:$0xff]
    %v419 = vld [vmem:[%s6 + $0x28] sm:$0xff]
    %v420 = vld [vmem:[%s6 + $0x30] sm:$0xff]
    %v421 = vld [vmem:[%s6 + $0x38] sm:$0xff]
    %v422 = vld [vmem:[%s6 + $0x40] sm:$0xff]
    %v423 = vld [vmem:[%s6 + $0x48] sm:$0xff]
    %v424 = vld [vmem:[%s6 + $0x50] sm:$0xff]
    %v425 = vld [vmem:[%s6 + $0x58] sm:$0xff]
    %v426 = vld [vmem:[%s6 + $0x60] sm:$0xff]
    %v427 = vld [vmem:[%s6 + $0x68] sm:$0xff]
    %v428 = vld [vmem:[%s6 + $0x70] sm:$0xff]
    %v429 = vld [vmem:[%s6 + $0x78] sm:$0xff]
    %430 = vmatprep.subr.mxu0 0.0
    %431 = vmatpush1.msra.mxu0 %v414
    %432 = vmatprep.subr.mxu0 0.0
    %433 = vmatpush1.msra.mxu0 %v415
    %434 = vmatprep.subr.mxu0 0.0
    %435 = vmatpush1.msra.mxu0 %v416
    %436 = vmatprep.subr.mxu0 0.0
    %437 = vmatpush1.msra.mxu0 %v417
    %438 = vmatprep.subr.mxu0 0.0
    %439 = vmatpush1.msra.mxu0 %v418
    %440 = vmatprep.subr.mxu0 0.0
    %441 = vmatpush1.msra.mxu0 %v419
    %442 = vmatprep.subr.mxu0 0.0
    %443 = vmatpush1.msra.mxu0 %v420
    %444 = vmatprep.subr.mxu0 0.0
    %445 = vmatpush1.msra.mxu0 %v421
    %446 = vmatprep.subr.mxu0 0.0
    %447 = vmatpush1.msra.mxu0 %v422
    %448 = vmatprep.subr.mxu0 0.0
    %449 = vmatpush1.msra.mxu0 %v423
    %450 = vmatprep.subr.mxu0 0.0
    %451 = vmatpush1.msra.mxu0 %v424
    %452 = vmatprep.subr.mxu0 0.0
    %453 = vmatpush1.msra.mxu0 %v425
    %454 = vmatprep.subr.mxu0 0.0
    %455 = vmatpush1.msra.mxu0 %v426
    %456 = vmatprep.subr.mxu0 0.0
    %457 = vmatpush1.msra.mxu0 %v427
    %458 = vmatprep.subr.mxu0 0.0
    %459 = vmatpush1.msra.mxu0 %v428
    %460 = vmatprep.subr.mxu0 0.0
    %461 = vmatpush1.msra.mxu0 %v429
    %462 = vmatprep.subr.mxu0 0.0
    %463 = vmatpush1.msra.mxu0 0.0
    %464 = vmatprep.subr.mxu0 0.0
    %465 = vmatpush1.msra.mxu0 0.0
    %466 = vmatprep.subr.mxu0 0.0
    %467 = vmatpush1.msra.mxu0 0.0
    %468 = vmatprep.subr.mxu0 0.0
    %469 = vmatpush1.msra.mxu0 0.0
    %470 = vmatprep.subr.mxu0 0.0
    %471 = vmatpush1.msra.mxu0 0.0
    %472 = vmatprep.subr.mxu0 0.0
    %473 = vmatpush1.msra.mxu0 0.0
    %474 = vmatprep.subr.mxu0 0.0
    %475 = vmatpush1.msra.mxu0 0.0
    %476 = vmatprep.subr.mxu0 0.0
    %477 = vmatpush1.msra.mxu0 0.0
    %478 = vmatprep.subr.mxu0 0.0
    %479 = vmatpush1.msra.mxu0 0.0
    %480 = vmatprep.subr.mxu0 0.0
    %481 = vmatpush1.msra.mxu0 0.0
    %482 = vmatprep.subr.mxu0 0.0
    %483 = vmatpush1.msra.mxu0 0.0
    %484 = vmatprep.subr.mxu0 0.0
    %485 = vmatpush1.msra.mxu0 0.0
    %486 = vmatprep.subr.mxu0 0.0
    %487 = vmatpush1.msra.mxu0 0.0
    %488 = vmatprep.subr.mxu0 0.0
    %489 = vmatpush1.msra.mxu0 0.0
    %490 = vmatprep.subr.mxu0 0.0
    %491 = vmatpush1.msra.mxu0 0.0
    %492 = vmatprep.subr.mxu0 0.0
    %493 = vmatpush1.msra.mxu0 0.0
    %494 = vmatprep.mubr.f32.mxu0 0.0
    %495 = vmatmul.mubr.f32.gmra.mrb[0].mxu0 %v253
    %v496 = vpop.f32.mrb[0].mxu0
    %v497 = vadd.f32 0.0, %v496
    %v498 = vpop.f32.mrb[0].mxu0
    %499 = vmatprep.mubr.f32.mxu0 0.0
    %500 = vmatmul.mubr.f32.gmra.mrb[0].mxu0 %v254
    %v501 = vpop.f32.mrb[0].mxu0
    %v502 = vadd.f32 0.0, %v501
    %v503 = vpop.f32.mrb[0].mxu0
    %504 = vmatprep.mubr.f32.mxu0 0.0
    %505 = vmatmul.mubr.f32.gmra.mrb[0].mxu0 %v255
    %v506 = vpop.f32.mrb[0].mxu0
    %v507 = vadd.f32 0.0, %v506
    %v508 = vpop.f32.mrb[0].mxu0
    %509 = vmatprep.mubr.f32.mxu0 0.0
    %510 = vmatmul.mubr.f32.gmra.mrb[0].mxu0 %v256
    %v511 = vpop.f32.mrb[0].mxu0
    %v512 = vadd.f32 0.0, %v511
    %v513 = vpop.f32.mrb[0].mxu0
    %514 = vdwg.mxu0
    %v515 = vld [vmem:[%s7] sm:$0xff]
    %v516 = vld [vmem:[%s7 + $0x8] sm:$0xff]
    %v517 = vld [vmem:[%s7 + $0x10] sm:$0xff]
    %v518 = vld [vmem:[%s7 + $0x18] sm:$0xff]
    %v519 = vld [vmem:[%s7 + $0x20] sm:$0xff]
    %v520 = vld [vmem:[%s7 + $0x28] sm:$0xff]
    %v521 = vld [vmem:[%s7 + $0x30] sm:$0xff]
    %v522 = vld [vmem:[%s7 + $0x38] sm:$0xff]
    %v523 = vld [vmem:[%s7 + $0x40] sm:$0xff]
    %v524 = vld [vmem:[%s7 + $0x48] sm:$0xff]
    %v525 = vld [vmem:[%s7 + $0x50] sm:$0xff]
    %v526 = vld [vmem:[%s7 + $0x58] sm:$0xff]
    %v527 = vld [vmem:[%s7 + $0x60] sm:$0xff]
    %v528 = vld [vmem:[%s7 + $0x68] sm:$0xff]
    %v529 = vld [vmem:[%s7 + $0x70] sm:$0xff]
    %v530 = vld [vmem:[%s7 + $0x78] sm:$0xff]
    %531 = vmatprep.subr.mxu0 0.0
    %532 = vmatpush1.msra.mxu0 %v515
    %533 = vmatprep.subr.mxu0 0.0
    %534 = vmatpush1.msra.mxu0 %v516
    %535 = vmatprep.subr.mxu0 0.0
    %536 = vmatpush1.msra.mxu0 %v517
    %537 = vmatprep.subr.mxu0 0.0
    %538 = vmatpush1.msra.mxu0 %v518
    %539 = vmatprep.subr.mxu0 0.0
    %540 = vmatpush1.msra.mxu0 %v519
    %541 = vmatprep.subr.mxu0 0.0
    %542 = vmatpush1.msra.mxu0 %v520
    %543 = vmatprep.subr.mxu0 0.0
    %544 = vmatpush1.msra.mxu0 %v521
    %545 = vmatprep.subr.mxu0 0.0
    %546 = vmatpush1.msra.mxu0 %v522
    %547 = vmatprep.subr.mxu0 0.0
    %548 = vmatpush1.msra.mxu0 %v523
    %549 = vmatprep.subr.mxu0 0.0
    %550 = vmatpush1.msra.mxu0 %v524
    %551 = vmatprep.subr.mxu0 0.0
    %552 = vmatpush1.msra.mxu0 %v525
    %553 = vmatprep.subr.mxu0 0.0
    %554 = vmatpush1.msra.mxu0 %v526
    %555 = vmatprep.subr.mxu0 0.0
    %556 = vmatpush1.msra.mxu0 %v527
    %557 = vmatprep.subr.mxu0 0.0
    %558 = vmatpush1.msra.mxu0 %v528
    %559 = vmatprep.subr.mxu0 0.0
    %560 = vmatpush1.msra.mxu0 %v529
    %561 = vmatprep.subr.mxu0 0.0
    %562 = vmatpush1.msra.mxu0 %v530
    %563 = vmatprep.subr.mxu0 0.0
    %564 = vmatpush1.msra.mxu0 0.0
    %565 = vmatprep.subr.mxu0 0.0
    %566 = vmatpush1.msra.mxu0 0.0
    %567 = vmatprep.subr.mxu0 0.0
    %568 = vmatpush1.msra.mxu0 0.0
    %569 = vmatprep.subr.mxu0 0.0
    %570 = vmatpush1.msra.mxu0 0.0
    %571 = vmatprep.subr.mxu0 0.0
    %572 = vmatpush1.msra.mxu0 0.0
    %573 = vmatprep.subr.mxu0 0.0
    %574 = vmatpush1.msra.mxu0 0.0
    %575 = vmatprep.subr.mxu0 0.0
    %576 = vmatpush1.msra.mxu0 0.0
    %577 = vmatprep.subr.mxu0 0.0
    %578 = vmatpush1.msra.mxu0 0.0
    %579 = vmatprep.subr.mxu0 0.0
    %580 = vmatpush1.msra.mxu0 0.0
    %581 = vmatprep.subr.mxu0 0.0
    %582 = vmatpush1.msra.mxu0 0.0
    %583 = vmatprep.subr.mxu0 0.0
    %584 = vmatpush1.msra.mxu0 0.0
    %585 = vmatprep.subr.mxu0 0.0
    %586 = vmatpush1.msra.mxu0 0.0
    %587 = vmatprep.subr.mxu0 0.0
    %588 = vmatpush1.msra.mxu0 0.0
    %589 = vmatprep.subr.mxu0 0.0
    %590 = vmatpush1.msra.mxu0 0.0
    %591 = vmatprep.subr.mxu0 0.0
    %592 = vmatpush1.msra.mxu0 0.0
    %593 = vmatprep.subr.mxu0 0.0
    %594 = vmatpush1.msra.mxu0 0.0
    %595 = vmatprep.mubr.f32.mxu0 0.0
    %596 = vmatmul.mubr.f32.gmra.mrb[0].mxu0 %v309
    %v597 = vpop.f32.mrb[0].mxu0
    %v598 = vadd.f32 0.0, %v597
    %v599 = vpop.f32.mrb[0].mxu0
    %600 = vmatprep.mubr.f32.mxu0 0.0
    %601 = vmatmul.mubr.f32.gmra.mrb[0].mxu0 %v310
    %v602 = vpop.f32.mrb[0].mxu0
    %v603 = vadd.f32 0.0, %v602
    %v604 = vpop.f32.mrb[0].mxu0
    %605 = vmatprep.mubr.f32.mxu0 0.0
    %606 = vmatmul.mubr.f32.gmra.mrb[0].mxu0 %v311
    %v607 = vpop.f32.mrb[0].mxu0
    %v608 = vadd.f32 0.0, %v607
    %v609 = vpop.f32.mrb[0].mxu0
    %610 = vmatprep.mubr.f32.mxu0 0.0
    %611 = vmatmul.mubr.f32.gmra.mrb[0].mxu0 %v312
    %v612 = vpop.f32.mrb[0].mxu0
    %v613 = vadd.f32 0.0, %v612
    %v614 = vpop.f32.mrb[0].mxu0
    %615 = vdwg.mxu0
    %620 = vrot.lane.b32.xlu0 %v396, 96
    %v621 = vpop.permute.xlu0 %620
    %622 = vrot.lane.b32.xlu0 %v401, 96
    %v623 = vpop.permute.xlu0 %622
    %624 = vrot.lane.b32.xlu0 %v406, 96
    %v625 = vpop.permute.xlu0 %624
    %626 = vrot.lane.b32.xlu0 %v411, 96
    %v627 = vpop.permute.xlu0 %626
    %628 = vrot.lane.b32.xlu0 %v396, 64
    %v629 = vpop.permute.xlu0 %628
    %630 = vrot.lane.b32.xlu0 %v401, 64
    %v631 = vpop.permute.xlu0 %630
    %632 = vrot.lane.b32.xlu0 %v406, 64
    %v633 = vpop.permute.xlu0 %632
    %634 = vrot.lane.b32.xlu0 %v411, 64
    %v635 = vpop.permute.xlu0 %634
    %636 = vrot.lane.b32.xlu0 %v396, 32
    %v637 = vpop.permute.xlu0 %636
    %638 = vrot.lane.b32.xlu0 %v401, 32
    %v639 = vpop.permute.xlu0 %638
    %640 = vrot.lane.b32.xlu0 %v406, 32
    %v641 = vpop.permute.xlu0 %640
    %642 = vrot.lane.b32.xlu0 %v411, 32
    %v643 = vpop.permute.xlu0 %642
    %648 = vrot.lane.b32.xlu0 %v497, 96
    %v649 = vpop.permute.xlu0 %648
    %650 = vrot.lane.b32.xlu0 %v502, 96
    %v651 = vpop.permute.xlu0 %650
    %652 = vrot.lane.b32.xlu0 %v507, 96
    %v653 = vpop.permute.xlu0 %652
    %654 = vrot.lane.b32.xlu0 %v512, 96
    %v655 = vpop.permute.xlu0 %654
    %656 = vrot.lane.b32.xlu0 %v497, 64
    %v657 = vpop.permute.xlu0 %656
    %658 = vrot.lane.b32.xlu0 %v502, 64
    %v659 = vpop.permute.xlu0 %658
    %660 = vrot.lane.b32.xlu0 %v507, 64
    %v661 = vpop.permute.xlu0 %660
    %662 = vrot.lane.b32.xlu0 %v512, 64
    %v663 = vpop.permute.xlu0 %662
    %664 = vrot.lane.b32.xlu0 %v497, 32
    %v665 = vpop.permute.xlu0 %664
    %666 = vrot.lane.b32.xlu0 %v502, 32
    %v667 = vpop.permute.xlu0 %666
    %668 = vrot.lane.b32.xlu0 %v507, 32
    %v669 = vpop.permute.xlu0 %668
    %670 = vrot.lane.b32.xlu0 %v512, 32
    %v671 = vpop.permute.xlu0 %670
    %676 = vrot.lane.b32.xlu0 %v598, 96
    %v677 = vpop.permute.xlu0 %676
    %678 = vrot.lane.b32.xlu0 %v603, 96
    %v679 = vpop.permute.xlu0 %678
    %680 = vrot.lane.b32.xlu0 %v608, 96
    %v681 = vpop.permute.xlu0 %680
    %682 = vrot.lane.b32.xlu0 %v613, 96
    %v683 = vpop.permute.xlu0 %682
    %688 = vrot.lane.b32.xlu0 %v598, 64
    %v689 = vpop.permute.xlu0 %688
    %690 = vrot.lane.b32.xlu0 %v603, 64
    %v691 = vpop.permute.xlu0 %690
    %692 = vrot.lane.b32.xlu0 %v608, 64
    %v693 = vpop.permute.xlu0 %692
    %694 = vrot.lane.b32.xlu0 %v613, 64
    %v695 = vpop.permute.xlu0 %694
    %700 = vrot.lane.b32.xlu0 %v598, 32
    %v701 = vpop.permute.xlu0 %700
    %702 = vrot.lane.b32.xlu0 %v603, 32
    %v703 = vpop.permute.xlu0 %702
    %704 = vrot.lane.b32.xlu0 %v608, 32
    %v705 = vpop.permute.xlu0 %704
    %706 = vrot.lane.b32.xlu0 %v613, 32
    %v707 = vpop.permute.xlu0 %706
    %vm712 = vcmask 261120
    %v713 = vsel %vm712, %v396, 0
    %v715 = vsel %vm712, %v401, 0
    %v717 = vsel %vm712, %v497, 0
    %v719 = vsel %vm712, %v502, 0
    %721 = vmatprep.subr.mxu0 0.0
    %722 = vmatpush1.xpose.msra.mxu0 %v717
    %723 = vmatprep.subr.mxu0 0.0
    %724 = vmatpush1.xpose.msra.mxu0 %v719
    %725 = vmatprep.subr.mxu0 0.0
    %726 = vmatpush1.xpose.msra.mxu0 0.0
    %727 = vmatprep.subr.mxu0 0.0
    %728 = vmatpush1.xpose.msra.mxu0 0.0
    %729 = vmatprep.subr.mxu0 0.0
    %730 = vmatpush1.xpose.msra.mxu0 0.0
    %731 = vmatprep.subr.mxu0 0.0
    %732 = vmatpush1.xpose.msra.mxu0 0.0
    %733 = vmatprep.subr.mxu0 0.0
    %734 = vmatpush1.xpose.msra.mxu0 0.0
    %735 = vmatprep.subr.mxu0 0.0
    %736 = vmatpush1.xpose.msra.mxu0 0.0
    %737 = vmatprep.subr.mxu0 0.0
    %738 = vmatpush1.xpose.msra.mxu0 0.0
    %739 = vmatprep.subr.mxu0 0.0
    %740 = vmatpush1.xpose.msra.mxu0 0.0
    %741 = vmatprep.subr.mxu0 0.0
    %742 = vmatpush1.xpose.msra.mxu0 0.0
    %743 = vmatprep.subr.mxu0 0.0
    %744 = vmatpush1.xpose.msra.mxu0 0.0
    %745 = vmatprep.subr.mxu0 0.0
    %746 = vmatpush1.xpose.msra.mxu0 0.0
    %747 = vmatprep.subr.mxu0 0.0
    %748 = vmatpush1.xpose.msra.mxu0 0.0
    %749 = vmatprep.subr.mxu0 0.0
    %750 = vmatpush1.xpose.msra.mxu0 0.0
    %751 = vmatprep.subr.mxu0 0.0
    %752 = vmatpush1.xpose.msra.mxu0 0.0
    %753 = vmatprep.subr.mxu0 0.0
    %754 = vmatpush1.xpose.msra.mxu0 0.0
    %755 = vmatprep.subr.mxu0 0.0
    %756 = vmatpush1.xpose.msra.mxu0 0.0
    %757 = vmatprep.subr.mxu0 0.0
    %758 = vmatpush1.xpose.msra.mxu0 0.0
    %759 = vmatprep.subr.mxu0 0.0
    %760 = vmatpush1.xpose.msra.mxu0 0.0
    %761 = vmatprep.subr.mxu0 0.0
    %762 = vmatpush1.xpose.msra.mxu0 0.0
    %763 = vmatprep.subr.mxu0 0.0
    %764 = vmatpush1.xpose.msra.mxu0 0.0
    %765 = vmatprep.subr.mxu0 0.0
    %766 = vmatpush1.xpose.msra.mxu0 0.0
    %767 = vmatprep.subr.mxu0 0.0
    %768 = vmatpush1.xpose.msra.mxu0 0.0
    %769 = vmatprep.subr.mxu0 0.0
    %770 = vmatpush1.xpose.msra.mxu0 0.0
    %771 = vmatprep.subr.mxu0 0.0
    %772 = vmatpush1.xpose.msra.mxu0 0.0
    %773 = vmatprep.subr.mxu0 0.0
    %774 = vmatpush1.xpose.msra.mxu0 0.0
    %775 = vmatprep.subr.mxu0 0.0
    %776 = vmatpush1.xpose.msra.mxu0 0.0
    %777 = vmatprep.subr.mxu0 0.0
    %778 = vmatpush1.xpose.msra.mxu0 0.0
    %779 = vmatprep.subr.mxu0 0.0
    %780 = vmatpush1.xpose.msra.mxu0 0.0
    %781 = vmatprep.subr.mxu0 0.0
    %782 = vmatpush1.xpose.msra.mxu0 0.0
    %783 = vmatprep.subr.mxu0 0.0
    %784 = vmatpush1.xpose.msra.mxu0 0.0
    %785 = vmatprep.mubr.f32.mxu0 0.0
    %786 = vmatmul.mubr.f32.gmra.mrb[0].mxu0 %v713
    %v787 = vpop.f32.mrb[0].mxu0
    %v788 = vadd.f32 0.0, %v787
    %v789 = vpop.f32.mrb[0].mxu0
    %790 = vmatprep.mubr.f32.mxu0 0.0
    %791 = vmatmul.mubr.f32.gmra.mrb[0].mxu0 %v715
    %v792 = vpop.f32.mrb[0].mxu0
    %v793 = vadd.f32 0.0, %v792
    %v794 = vpop.f32.mrb[0].mxu0
    %795 = vdwg.mxu0
    %v796 = vsel %vm712, %v406, 0
    %v798 = vsel %vm712, %v411, 0
    %v800 = vsel %vm712, %v507, 0
    %v802 = vsel %vm712, %v512, 0
    %804 = vmatprep.subr.mxu0 0.0
    %805 = vmatpush1.xpose.msra.mxu0 %v800
    %806 = vmatprep.subr.mxu0 0.0
    %807 = vmatpush1.xpose.msra.mxu0 %v802
    %808 = vmatprep.subr.mxu0 0.0
    %809 = vmatpush1.xpose.msra.mxu0 0.0
    %810 = vmatprep.subr.mxu0 0.0
    %811 = vmatpush1.xpose.msra.mxu0 0.0
    %812 = vmatprep.subr.mxu0 0.0
    %813 = vmatpush1.xpose.msra.mxu0 0.0
    %814 = vmatprep.subr.mxu0 0.0
    %815 = vmatpush1.xpose.msra.mxu0 0.0
    %816 = vmatprep.subr.mxu0 0.0
    %817 = vmatpush1.xpose.msra.mxu0 0.0
    %818 = vmatprep.subr.mxu0 0.0
    %819 = vmatpush1.xpose.msra.mxu0 0.0
    %820 = vmatprep.subr.mxu0 0.0
    %821 = vmatpush1.xpose.msra.mxu0 0.0
    %822 = vmatprep.subr.mxu0 0.0
    %823 = vmatpush1.xpose.msra.mxu0 0.0
    %824 = vmatprep.subr.mxu0 0.0
    %825 = vmatpush1.xpose.msra.mxu0 0.0
    %826 = vmatprep.subr.mxu0 0.0
    %827 = vmatpush1.xpose.msra.mxu0 0.0
    %828 = vmatprep.subr.mxu0 0.0
    %829 = vmatpush1.xpose.msra.mxu0 0.0
    %830 = vmatprep.subr.mxu0 0.0
    %831 = vmatpush1.xpose.msra.mxu0 0.0
    %832 = vmatprep.subr.mxu0 0.0
    %833 = vmatpush1.xpose.msra.mxu0 0.0
    %834 = vmatprep.subr.mxu0 0.0
    %835 = vmatpush1.xpose.msra.mxu0 0.0
    %836 = vmatprep.subr.mxu0 0.0
    %837 = vmatpush1.xpose.msra.mxu0 0.0
    %838 = vmatprep.subr.mxu0 0.0
    %839 = vmatpush1.xpose.msra.mxu0 0.0
    %840 = vmatprep.subr.mxu0 0.0
    %841 = vmatpush1.xpose.msra.mxu0 0.0
    %842 = vmatprep.subr.mxu0 0.0
    %843 = vmatpush1.xpose.msra.mxu0 0.0
    %844 = vmatprep.subr.mxu0 0.0
    %845 = vmatpush1.xpose.msra.mxu0 0.0
    %846 = vmatprep.subr.mxu0 0.0
    %847 = vmatpush1.xpose.msra.mxu0 0.0
    %848 = vmatprep.subr.mxu0 0.0
    %849 = vmatpush1.xpose.msra.mxu0 0.0
    %850 = vmatprep.subr.mxu0 0.0
    %851 = vmatpush1.xpose.msra.mxu0 0.0
    %852 = vmatprep.subr.mxu0 0.0
    %853 = vmatpush1.xpose.msra.mxu0 0.0
    %854 = vmatprep.subr.mxu0 0.0
    %855 = vmatpush1.xpose.msra.mxu0 0.0
    %856 = vmatprep.subr.mxu0 0.0
    %857 = vmatpush1.xpose.msra.mxu0 0.0
    %858 = vmatprep.subr.mxu0 0.0
    %859 = vmatpush1.xpose.msra.mxu0 0.0
    %860 = vmatprep.subr.mxu0 0.0
    %861 = vmatpush1.xpose.msra.mxu0 0.0
    %862 = vmatprep.subr.mxu0 0.0
    %863 = vmatpush1.xpose.msra.mxu0 0.0
    %864 = vmatprep.subr.mxu0 0.0
    %865 = vmatpush1.xpose.msra.mxu0 0.0
    %866 = vmatprep.subr.mxu0 0.0
    %867 = vmatpush1.xpose.msra.mxu0 0.0
    %868 = vmatprep.mubr.f32.mxu0 0.0
    %869 = vmatmul.mubr.f32.gmra.mrb[0].mxu0 %v796
    %v870 = vpop.f32.mrb[0].mxu0
    %v871 = vadd.f32 0.0, %v870
    %v872 = vpop.f32.mrb[0].mxu0
    %873 = vmatprep.mubr.f32.mxu0 0.0
    %874 = vmatmul.mubr.f32.gmra.mrb[0].mxu0 %v798
    %v875 = vpop.f32.mrb[0].mxu0
    %v876 = vadd.f32 0.0, %v875
    %v877 = vpop.f32.mrb[0].mxu0
    %878 = vdwg.mxu0
    %v879 = vsel %vm712, %v621, 0
    %v881 = vsel %vm712, %v623, 0
    %v883 = vsel %vm712, %v649, 0
    %v885 = vsel %vm712, %v651, 0
    %887 = vmatprep.subr.mxu0 0.0
    %888 = vmatpush1.xpose.msra.mxu0 %v883
    %889 = vmatprep.subr.mxu0 0.0
    %890 = vmatpush1.xpose.msra.mxu0 %v885
    %891 = vmatprep.subr.mxu0 0.0
    %892 = vmatpush1.xpose.msra.mxu0 0.0
    %893 = vmatprep.subr.mxu0 0.0
    %894 = vmatpush1.xpose.msra.mxu0 0.0
    %895 = vmatprep.subr.mxu0 0.0
    %896 = vmatpush1.xpose.msra.mxu0 0.0
    %897 = vmatprep.subr.mxu0 0.0
    %898 = vmatpush1.xpose.msra.mxu0 0.0
    %899 = vmatprep.subr.mxu0 0.0
    %900 = vmatpush1.xpose.msra.mxu0 0.0
    %901 = vmatprep.subr.mxu0 0.0
    %902 = vmatpush1.xpose.msra.mxu0 0.0
    %903 = vmatprep.subr.mxu0 0.0
    %904 = vmatpush1.xpose.msra.mxu0 0.0
    %905 = vmatprep.subr.mxu0 0.0
    %906 = vmatpush1.xpose.msra.mxu0 0.0
    %907 = vmatprep.subr.mxu0 0.0
    %908 = vmatpush1.xpose.msra.mxu0 0.0
    %909 = vmatprep.subr.mxu0 0.0
    %910 = vmatpush1.xpose.msra.mxu0 0.0
    %911 = vmatprep.subr.mxu0 0.0
    %912 = vmatpush1.xpose.msra.mxu0 0.0
    %913 = vmatprep.subr.mxu0 0.0
    %914 = vmatpush1.xpose.msra.mxu0 0.0
    %915 = vmatprep.subr.mxu0 0.0
    %916 = vmatpush1.xpose.msra.mxu0 0.0
    %917 = vmatprep.subr.mxu0 0.0
    %918 = vmatpush1.xpose.msra.mxu0 0.0
    %919 = vmatprep.subr.mxu0 0.0
    %920 = vmatpush1.xpose.msra.mxu0 0.0
    %921 = vmatprep.subr.mxu0 0.0
    %922 = vmatpush1.xpose.msra.mxu0 0.0
    %923 = vmatprep.subr.mxu0 0.0
    %924 = vmatpush1.xpose.msra.mxu0 0.0
    %925 = vmatprep.subr.mxu0 0.0
    %926 = vmatpush1.xpose.msra.mxu0 0.0
    %927 = vmatprep.subr.mxu0 0.0
    %928 = vmatpush1.xpose.msra.mxu0 0.0
    %929 = vmatprep.subr.mxu0 0.0
    %930 = vmatpush1.xpose.msra.mxu0 0.0
    %931 = vmatprep.subr.mxu0 0.0
    %932 = vmatpush1.xpose.msra.mxu0 0.0
    %933 = vmatprep.subr.mxu0 0.0
    %934 = vmatpush1.xpose.msra.mxu0 0.0
    %935 = vmatprep.subr.mxu0 0.0
    %936 = vmatpush1.xpose.msra.mxu0 0.0
    %937 = vmatprep.subr.mxu0 0.0
    %938 = vmatpush1.xpose.msra.mxu0 0.0
    %939 = vmatprep.subr.mxu0 0.0
    %940 = vmatpush1.xpose.msra.mxu0 0.0
    %941 = vmatprep.subr.mxu0 0.0
    %942 = vmatpush1.xpose.msra.mxu0 0.0
    %943 = vmatprep.subr.mxu0 0.0
    %944 = vmatpush1.xpose.msra.mxu0 0.0
    %945 = vmatprep.subr.mxu0 0.0
    %946 = vmatpush1.xpose.msra.mxu0 0.0
    %947 = vmatprep.subr.mxu0 0.0
    %948 = vmatpush1.xpose.msra.mxu0 0.0
    %949 = vmatprep.subr.mxu0 0.0
    %950 = vmatpush1.xpose.msra.mxu0 0.0
    %951 = vmatprep.mubr.f32.mxu0 0.0
    %952 = vmatmul.mubr.f32.gmra.mrb[0].mxu0 %v879
    %v953 = vpop.f32.mrb[0].mxu0
    %v954 = vadd.f32 0.0, %v953
    %v955 = vpop.f32.mrb[0].mxu0
    %956 = vmatprep.mubr.f32.mxu0 0.0
    %957 = vmatmul.mubr.f32.gmra.mrb[0].mxu0 %v881
    %v958 = vpop.f32.mrb[0].mxu0
    %v959 = vadd.f32 0.0, %v958
    %v960 = vpop.f32.mrb[0].mxu0
    %961 = vdwg.mxu0
    %v962 = vsel %vm712, %v625, 0
    %v964 = vsel %vm712, %v627, 0
    %v966 = vsel %vm712, %v653, 0
    %v968 = vsel %vm712, %v655, 0
    %970 = vmatprep.subr.mxu0 0.0
    %971 = vmatpush1.xpose.msra.mxu0 %v966
    %972 = vmatprep.subr.mxu0 0.0
    %973 = vmatpush1.xpose.msra.mxu0 %v968
    %974 = vmatprep.subr.mxu0 0.0
    %975 = vmatpush1.xpose.msra.mxu0 0.0
    %976 = vmatprep.subr.mxu0 0.0
    %977 = vmatpush1.xpose.msra.mxu0 0.0
    %978 = vmatprep.subr.mxu0 0.0
    %979 = vmatpush1.xpose.msra.mxu0 0.0
    %980 = vmatprep.subr.mxu0 0.0
    %981 = vmatpush1.xpose.msra.mxu0 0.0
    %982 = vmatprep.subr.mxu0 0.0
    %983 = vmatpush1.xpose.msra.mxu0 0.0
    %984 = vmatprep.subr.mxu0 0.0
    %985 = vmatpush1.xpose.msra.mxu0 0.0
    %986 = vmatprep.subr.mxu0 0.0
    %987 = vmatpush1.xpose.msra.mxu0 0.0
    %988 = vmatprep.subr.mxu0 0.0
    %989 = vmatpush1.xpose.msra.mxu0 0.0
    %990 = vmatprep.subr.mxu0 0.0
    %991 = vmatpush1.xpose.msra.mxu0 0.0
    %992 = vmatprep.subr.mxu0 0.0
    %993 = vmatpush1.xpose.msra.mxu0 0.0
    %994 = vmatprep.subr.mxu0 0.0
    %995 = vmatpush1.xpose.msra.mxu0 0.0
    %996 = vmatprep.subr.mxu0 0.0
    %997 = vmatpush1.xpose.msra.mxu0 0.0
    %998 = vmatprep.subr.mxu0 0.0
    %999 = vmatpush1.xpose.msra.mxu0 0.0
    %1000 = vmatprep.subr.mxu0 0.0
    %1001 = vmatpush1.xpose.msra.mxu0 0.0
    %1002 = vmatprep.subr.mxu0 0.0
    %1003 = vmatpush1.xpose.msra.mxu0 0.0
    %1004 = vmatprep.subr.mxu0 0.0
    %1005 = vmatpush1.xpose.msra.mxu0 0.0
    %1006 = vmatprep.subr.mxu0 0.0
    %1007 = vmatpush1.xpose.msra.mxu0 0.0
    %1008 = vmatprep.subr.mxu0 0.0
    %1009 = vmatpush1.xpose.msra.mxu0 0.0
    %1010 = vmatprep.subr.mxu0 0.0
    %1011 = vmatpush1.xpose.msra.mxu0 0.0
    %1012 = vmatprep.subr.mxu0 0.0
    %1013 = vmatpush1.xpose.msra.mxu0 0.0
    %1014 = vmatprep.subr.mxu0 0.0
    %1015 = vmatpush1.xpose.msra.mxu0 0.0
    %1016 = vmatprep.subr.mxu0 0.0
    %1017 = vmatpush1.xpose.msra.mxu0 0.0
    %1018 = vmatprep.subr.mxu0 0.0
    %1019 = vmatpush1.xpose.msra.mxu0 0.0
    %1020 = vmatprep.subr.mxu0 0.0
    %1021 = vmatpush1.xpose.msra.mxu0 0.0
    %1022 = vmatprep.subr.mxu0 0.0
    %1023 = vmatpush1.xpose.msra.mxu0 0.0
    %1024 = vmatprep.subr.mxu0 0.0
    %1025 = vmatpush1.xpose.msra.mxu0 0.0
    %1026 = vmatprep.subr.mxu0 0.0
    %1027 = vmatpush1.xpose.msra.mxu0 0.0
    %1028 = vmatprep.subr.mxu0 0.0
    %1029 = vmatpush1.xpose.msra.mxu0 0.0
    %1030 = vmatprep.subr.mxu0 0.0
    %1031 = vmatpush1.xpose.msra.mxu0 0.0
    %1032 = vmatprep.subr.mxu0 0.0
    %1033 = vmatpush1.xpose.msra.mxu0 0.0
    %1034 = vmatprep.mubr.f32.mxu0 0.0
    %1035 = vmatmul.mubr.f32.gmra.mrb[0].mxu0 %v962
    %v1036 = vpop.f32.mrb[0].mxu0
    %v1037 = vadd.f32 0.0, %v1036
    %v1038 = vpop.f32.mrb[0].mxu0
    %1039 = vmatprep.mubr.f32.mxu0 0.0
    %1040 = vmatmul.mubr.f32.gmra.mrb[0].mxu0 %v964
    %v1041 = vpop.f32.mrb[0].mxu0
    %v1042 = vadd.f32 0.0, %v1041
    %v1043 = vpop.f32.mrb[0].mxu0
    %1044 = vdwg.mxu0
    %v1045 = vsel %vm712, %v629, 0
    %v1047 = vsel %vm712, %v631, 0
    %v1049 = vsel %vm712, %v657, 0
    %v1051 = vsel %vm712, %v659, 0
    %1053 = vmatprep.subr.mxu0 0.0
    %1054 = vmatpush1.xpose.msra.mxu0 %v1049
    %1055 = vmatprep.subr.mxu0 0.0
    %1056 = vmatpush1.xpose.msra.mxu0 %v1051
    %1057 = vmatprep.subr.mxu0 0.0
    %1058 = vmatpush1.xpose.msra.mxu0 0.0
    %1059 = vmatprep.subr.mxu0 0.0
    %1060 = vmatpush1.xpose.msra.mxu0 0.0
    %1061 = vmatprep.subr.mxu0 0.0
    %1062 = vmatpush1.xpose.msra.mxu0 0.0
    %1063 = vmatprep.subr.mxu0 0.0
    %1064 = vmatpush1.xpose.msra.mxu0 0.0
    %1065 = vmatprep.subr.mxu0 0.0
    %1066 = vmatpush1.xpose.msra.mxu0 0.0
    %1067 = vmatprep.subr.mxu0 0.0
    %1068 = vmatpush1.xpose.msra.mxu0 0.0
    %1069 = vmatprep.subr.mxu0 0.0
    %1070 = vmatpush1.xpose.msra.mxu0 0.0
    %1071 = vmatprep.subr.mxu0 0.0
    %1072 = vmatpush1.xpose.msra.mxu0 0.0
    %1073 = vmatprep.subr.mxu0 0.0
    %1074 = vmatpush1.xpose.msra.mxu0 0.0
    %1075 = vmatprep.subr.mxu0 0.0
    %1076 = vmatpush1.xpose.msra.mxu0 0.0
    %1077 = vmatprep.subr.mxu0 0.0
    %1078 = vmatpush1.xpose.msra.mxu0 0.0
    %1079 = vmatprep.subr.mxu0 0.0
    %1080 = vmatpush1.xpose.msra.mxu0 0.0
    %1081 = vmatprep.subr.mxu0 0.0
    %1082 = vmatpush1.xpose.msra.mxu0 0.0
    %1083 = vmatprep.subr.mxu0 0.0
    %1084 = vmatpush1.xpose.msra.mxu0 0.0
    %1085 = vmatprep.subr.mxu0 0.0
    %1086 = vmatpush1.xpose.msra.mxu0 0.0
    %1087 = vmatprep.subr.mxu0 0.0
    %1088 = vmatpush1.xpose.msra.mxu0 0.0
    %1089 = vmatprep.subr.mxu0 0.0
    %1090 = vmatpush1.xpose.msra.mxu0 0.0
    %1091 = vmatprep.subr.mxu0 0.0
    %1092 = vmatpush1.xpose.msra.mxu0 0.0
    %1093 = vmatprep.subr.mxu0 0.0
    %1094 = vmatpush1.xpose.msra.mxu0 0.0
    %1095 = vmatprep.subr.mxu0 0.0
    %1096 = vmatpush1.xpose.msra.mxu0 0.0
    %1097 = vmatprep.subr.mxu0 0.0
    %1098 = vmatpush1.xpose.msra.mxu0 0.0
    %1099 = vmatprep.subr.mxu0 0.0
    %1100 = vmatpush1.xpose.msra.mxu0 0.0
    %1101 = vmatprep.subr.mxu0 0.0
    %1102 = vmatpush1.xpose.msra.mxu0 0.0
    %1103 = vmatprep.subr.mxu0 0.0
    %1104 = vmatpush1.xpose.msra.mxu0 0.0
    %1105 = vmatprep.subr.mxu0 0.0
    %1106 = vmatpush1.xpose.msra.mxu0 0.0
    %1107 = vmatprep.subr.mxu0 0.0
    %1108 = vmatpush1.xpose.msra.mxu0 0.0
    %1109 = vmatprep.subr.mxu0 0.0
    %1110 = vmatpush1.xpose.msra.mxu0 0.0
    %1111 = vmatprep.subr.mxu0 0.0
    %1112 = vmatpush1.xpose.msra.mxu0 0.0
    %1113 = vmatprep.subr.mxu0 0.0
    %1114 = vmatpush1.xpose.msra.mxu0 0.0
    %1115 = vmatprep.subr.mxu0 0.0
    %1116 = vmatpush1.xpose.msra.mxu0 0.0
    %1117 = vmatprep.mubr.f32.mxu0 0.0
    %1118 = vmatmul.mubr.f32.gmra.mrb[0].mxu0 %v1045
    %v1119 = vpop.f32.mrb[0].mxu0
    %v1120 = vadd.f32 0.0, %v1119
    %v1121 = vpop.f32.mrb[0].mxu0
    %1122 = vmatprep.mubr.f32.mxu0 0.0
    %1123 = vmatmul.mubr.f32.gmra.mrb[0].mxu0 %v1047
    %v1124 = vpop.f32.mrb[0].mxu0
    %v1125 = vadd.f32 0.0, %v1124
    %v1126 = vpop.f32.mrb[0].mxu0
    %1127 = vdwg.mxu0
    %v1128 = vsel %vm712, %v633, 0
    %v1130 = vsel %vm712, %v635, 0
    %v1132 = vsel %vm712, %v661, 0
    %v1134 = vsel %vm712, %v663, 0
    %1136 = vmatprep.subr.mxu0 0.0
    %1137 = vmatpush1.xpose.msra.mxu0 %v1132
    %1138 = vmatprep.subr.mxu0 0.0
    %1139 = vmatpush1.xpose.msra.mxu0 %v1134
    %1140 = vmatprep.subr.mxu0 0.0
    %1141 = vmatpush1.xpose.msra.mxu0 0.0
    %1142 = vmatprep.subr.mxu0 0.0
    %1143 = vmatpush1.xpose.msra.mxu0 0.0
    %1144 = vmatprep.subr.mxu0 0.0
    %1145 = vmatpush1.xpose.msra.mxu0 0.0
    %1146 = vmatprep.subr.mxu0 0.0
    %1147 = vmatpush1.xpose.msra.mxu0 0.0
    %1148 = vmatprep.subr.mxu0 0.0
    %1149 = vmatpush1.xpose.msra.mxu0 0.0
    %1150 = vmatprep.subr.mxu0 0.0
    %1151 = vmatpush1.xpose.msra.mxu0 0.0
    %1152 = vmatprep.subr.mxu0 0.0
    %1153 = vmatpush1.xpose.msra.mxu0 0.0
    %1154 = vmatprep.subr.mxu0 0.0
    %1155 = vmatpush1.xpose.msra.mxu0 0.0
    %1156 = vmatprep.subr.mxu0 0.0
    %1157 = vmatpush1.xpose.msra.mxu0 0.0
    %1158 = vmatprep.subr.mxu0 0.0
    %1159 = vmatpush1.xpose.msra.mxu0 0.0
    %1160 = vmatprep.subr.mxu0 0.0
    %1161 = vmatpush1.xpose.msra.mxu0 0.0
    %1162 = vmatprep.subr.mxu0 0.0
    %1163 = vmatpush1.xpose.msra.mxu0 0.0
    %1164 = vmatprep.subr.mxu0 0.0
    %1165 = vmatpush1.xpose.msra.mxu0 0.0
    %1166 = vmatprep.subr.mxu0 0.0
    %1167 = vmatpush1.xpose.msra.mxu0 0.0
    %1168 = vmatprep.subr.mxu0 0.0
    %1169 = vmatpush1.xpose.msra.mxu0 0.0
    %1170 = vmatprep.subr.mxu0 0.0
    %1171 = vmatpush1.xpose.msra.mxu0 0.0
    %1172 = vmatprep.subr.mxu0 0.0
    %1173 = vmatpush1.xpose.msra.mxu0 0.0
    %1174 = vmatprep.subr.mxu0 0.0
    %1175 = vmatpush1.xpose.msra.mxu0 0.0
    %1176 = vmatprep.subr.mxu0 0.0
    %1177 = vmatpush1.xpose.msra.mxu0 0.0
    %1178 = vmatprep.subr.mxu0 0.0
    %1179 = vmatpush1.xpose.msra.mxu0 0.0
    %1180 = vmatprep.subr.mxu0 0.0
    %1181 = vmatpush1.xpose.msra.mxu0 0.0
    %1182 = vmatprep.subr.mxu0 0.0
    %1183 = vmatpush1.xpose.msra.mxu0 0.0
    %1184 = vmatprep.subr.mxu0 0.0
    %1185 = vmatpush1.xpose.msra.mxu0 0.0
    %1186 = vmatprep.subr.mxu0 0.0
    %1187 = vmatpush1.xpose.msra.mxu0 0.0
    %1188 = vmatprep.subr.mxu0 0.0
    %1189 = vmatpush1.xpose.msra.mxu0 0.0
    %1190 = vmatprep.subr.mxu0 0.0
    %1191 = vmatpush1.xpose.msra.mxu0 0.0
    %1192 = vmatprep.subr.mxu0 0.0
    %1193 = vmatpush1.xpose.msra.mxu0 0.0
    %1194 = vmatprep.subr.mxu0 0.0
    %1195 = vmatpush1.xpose.msra.mxu0 0.0
    %1196 = vmatprep.subr.mxu0 0.0
    %1197 = vmatpush1.xpose.msra.mxu0 0.0
    %1198 = vmatprep.subr.mxu0 0.0
    %1199 = vmatpush1.xpose.msra.mxu0 0.0
    %1200 = vmatprep.mubr.f32.mxu0 0.0
    %1201 = vmatmul.mubr.f32.gmra.mrb[0].mxu0 %v1128
    %v1202 = vpop.f32.mrb[0].mxu0
    %v1203 = vadd.f32 0.0, %v1202
    %v1204 = vpop.f32.mrb[0].mxu0
    %1205 = vmatprep.mubr.f32.mxu0 0.0
    %1206 = vmatmul.mubr.f32.gmra.mrb[0].mxu0 %v1130
    %v1207 = vpop.f32.mrb[0].mxu0
    %v1208 = vadd.f32 0.0, %v1207
    %v1209 = vpop.f32.mrb[0].mxu0
    %1210 = vdwg.mxu0
    %v1211 = vsel %vm712, %v637, 0
    %v1213 = vsel %vm712, %v639, 0
    %v1215 = vsel %vm712, %v665, 0
    %v1217 = vsel %vm712, %v667, 0
    %1219 = vmatprep.subr.mxu0 0.0
    %1220 = vmatpush1.xpose.msra.mxu0 %v1215
    %1221 = vmatprep.subr.mxu0 0.0
    %1222 = vmatpush1.xpose.msra.mxu0 %v1217
    %1223 = vmatprep.subr.mxu0 0.0
    %1224 = vmatpush1.xpose.msra.mxu0 0.0
    %1225 = vmatprep.subr.mxu0 0.0
    %1226 = vmatpush1.xpose.msra.mxu0 0.0
    %1227 = vmatprep.subr.mxu0 0.0
    %1228 = vmatpush1.xpose.msra.mxu0 0.0
    %1229 = vmatprep.subr.mxu0 0.0
    %1230 = vmatpush1.xpose.msra.mxu0 0.0
    %1231 = vmatprep.subr.mxu0 0.0
    %1232 = vmatpush1.xpose.msra.mxu0 0.0
    %1233 = vmatprep.subr.mxu0 0.0
    %1234 = vmatpush1.xpose.msra.mxu0 0.0
    %1235 = vmatprep.subr.mxu0 0.0
    %1236 = vmatpush1.xpose.msra.mxu0 0.0
    %1237 = vmatprep.subr.mxu0 0.0
    %1238 = vmatpush1.xpose.msra.mxu0 0.0
    %1239 = vmatprep.subr.mxu0 0.0
    %1240 = vmatpush1.xpose.msra.mxu0 0.0
    %1241 = vmatprep.subr.mxu0 0.0
    %1242 = vmatpush1.xpose.msra.mxu0 0.0
    %1243 = vmatprep.subr.mxu0 0.0
    %1244 = vmatpush1.xpose.msra.mxu0 0.0
    %1245 = vmatprep.subr.mxu0 0.0
    %1246 = vmatpush1.xpose.msra.mxu0 0.0
    %1247 = vmatprep.subr.mxu0 0.0
    %1248 = vmatpush1.xpose.msra.mxu0 0.0
    %1249 = vmatprep.subr.mxu0 0.0
    %1250 = vmatpush1.xpose.msra.mxu0 0.0
    %1251 = vmatprep.subr.mxu0 0.0
    %1252 = vmatpush1.xpose.msra.mxu0 0.0
    %1253 = vmatprep.subr.mxu0 0.0
    %1254 = vmatpush1.xpose.msra.mxu0 0.0
    %1255 = vmatprep.subr.mxu0 0.0
    %1256 = vmatpush1.xpose.msra.mxu0 0.0
    %1257 = vmatprep.subr.mxu0 0.0
    %1258 = vmatpush1.xpose.msra.mxu0 0.0
    %1259 = vmatprep.subr.mxu0 0.0
    %1260 = vmatpush1.xpose.msra.mxu0 0.0
    %1261 = vmatprep.subr.mxu0 0.0
    %1262 = vmatpush1.xpose.msra.mxu0 0.0
    %1263 = vmatprep.subr.mxu0 0.0
    %1264 = vmatpush1.xpose.msra.mxu0 0.0
    %1265 = vmatprep.subr.mxu0 0.0
    %1266 = vmatpush1.xpose.msra.mxu0 0.0
    %1267 = vmatprep.subr.mxu0 0.0
    %1268 = vmatpush1.xpose.msra.mxu0 0.0
    %1269 = vmatprep.subr.mxu0 0.0
    %1270 = vmatpush1.xpose.msra.mxu0 0.0
    %1271 = vmatprep.subr.mxu0 0.0
    %1272 = vmatpush1.xpose.msra.mxu0 0.0
    %1273 = vmatprep.subr.mxu0 0.0
    %1274 = vmatpush1.xpose.msra.mxu0 0.0
    %1275 = vmatprep.subr.mxu0 0.0
    %1276 = vmatpush1.xpose.msra.mxu0 0.0
    %1277 = vmatprep.subr.mxu0 0.0
    %1278 = vmatpush1.xpose.msra.mxu0 0.0
    %1279 = vmatprep.subr.mxu0 0.0
    %1280 = vmatpush1.xpose.msra.mxu0 0.0
    %1281 = vmatprep.subr.mxu0 0.0
    %1282 = vmatpush1.xpose.msra.mxu0 0.0
    %1283 = vmatprep.mubr.f32.mxu0 0.0
    %1284 = vmatmul.mubr.f32.gmra.mrb[0].mxu0 %v1211
    %v1285 = vpop.f32.mrb[0].mxu0
    %v1286 = vadd.f32 0.0, %v1285
    %v1287 = vpop.f32.mrb[0].mxu0
    %1288 = vmatprep.mubr.f32.mxu0 0.0
    %1289 = vmatmul.mubr.f32.gmra.mrb[0].mxu0 %v1213
    %v1290 = vpop.f32.mrb[0].mxu0
    %v1291 = vadd.f32 0.0, %v1290
    %v1292 = vpop.f32.mrb[0].mxu0
    %1293 = vdwg.mxu0
    %v1294 = vsel %vm712, %v641, 0
    %v1296 = vsel %vm712, %v643, 0
    %v1298 = vsel %vm712, %v669, 0
    %v1300 = vsel %vm712, %v671, 0
    %1302 = vmatprep.subr.mxu0 0.0
    %1303 = vmatpush1.xpose.msra.mxu0 %v1298
    %1304 = vmatprep.subr.mxu0 0.0
    %1305 = vmatpush1.xpose.msra.mxu0 %v1300
    %1306 = vmatprep.subr.mxu0 0.0
    %1307 = vmatpush1.xpose.msra.mxu0 0.0
    %1308 = vmatprep.subr.mxu0 0.0
    %1309 = vmatpush1.xpose.msra.mxu0 0.0
    %1310 = vmatprep.subr.mxu0 0.0
    %1311 = vmatpush1.xpose.msra.mxu0 0.0
    %1312 = vmatprep.subr.mxu0 0.0
    %1313 = vmatpush1.xpose.msra.mxu0 0.0
    %1314 = vmatprep.subr.mxu0 0.0
    %1315 = vmatpush1.xpose.msra.mxu0 0.0
    %1316 = vmatprep.subr.mxu0 0.0
    %1317 = vmatpush1.xpose.msra.mxu0 0.0
    %1318 = vmatprep.subr.mxu0 0.0
    %1319 = vmatpush1.xpose.msra.mxu0 0.0
    %1320 = vmatprep.subr.mxu0 0.0
    %1321 = vmatpush1.xpose.msra.mxu0 0.0
    %1322 = vmatprep.subr.mxu0 0.0
    %1323 = vmatpush1.xpose.msra.mxu0 0.0
    %1324 = vmatprep.subr.mxu0 0.0
    %1325 = vmatpush1.xpose.msra.mxu0 0.0
    %1326 = vmatprep.subr.mxu0 0.0
    %1327 = vmatpush1.xpose.msra.mxu0 0.0
    %1328 = vmatprep.subr.mxu0 0.0
    %1329 = vmatpush1.xpose.msra.mxu0 0.0
    %1330 = vmatprep.subr.mxu0 0.0
    %1331 = vmatpush1.xpose.msra.mxu0 0.0
    %1332 = vmatprep.subr.mxu0 0.0
    %1333 = vmatpush1.xpose.msra.mxu0 0.0
    %1334 = vmatprep.subr.mxu0 0.0
    %1335 = vmatpush1.xpose.msra.mxu0 0.0
    %1336 = vmatprep.subr.mxu0 0.0
    %1337 = vmatpush1.xpose.msra.mxu0 0.0
    %1338 = vmatprep.subr.mxu0 0.0
    %1339 = vmatpush1.xpose.msra.mxu0 0.0
    %1340 = vmatprep.subr.mxu0 0.0
    %1341 = vmatpush1.xpose.msra.mxu0 0.0
    %1342 = vmatprep.subr.mxu0 0.0
    %1343 = vmatpush1.xpose.msra.mxu0 0.0
    %1344 = vmatprep.subr.mxu0 0.0
    %1345 = vmatpush1.xpose.msra.mxu0 0.0
    %1346 = vmatprep.subr.mxu0 0.0
    %1347 = vmatpush1.xpose.msra.mxu0 0.0
    %1348 = vmatprep.subr.mxu0 0.0
    %1349 = vmatpush1.xpose.msra.mxu0 0.0
    %1350 = vmatprep.subr.mxu0 0.0
    %1351 = vmatpush1.xpose.msra.mxu0 0.0
    %1352 = vmatprep.subr.mxu0 0.0
    %1353 = vmatpush1.xpose.msra.mxu0 0.0
    %1354 = vmatprep.subr.mxu0 0.0
    %1355 = vmatpush1.xpose.msra.mxu0 0.0
    %1356 = vmatprep.subr.mxu0 0.0
    %1357 = vmatpush1.xpose.msra.mxu0 0.0
    %1358 = vmatprep.subr.mxu0 0.0
    %1359 = vmatpush1.xpose.msra.mxu0 0.0
    %1360 = vmatprep.subr.mxu0 0.0
    %1361 = vmatpush1.xpose.msra.mxu0 0.0
    %1362 = vmatprep.subr.mxu0 0.0
    %1363 = vmatpush1.xpose.msra.mxu0 0.0
    %1364 = vmatprep.subr.mxu0 0.0
    %1365 = vmatpush1.xpose.msra.mxu0 0.0
    %1366 = vmatprep.mubr.f32.mxu0 0.0
    %1367 = vmatmul.mubr.f32.gmra.mrb[0].mxu0 %v1294
    %v1368 = vpop.f32.mrb[0].mxu0
    %v1369 = vadd.f32 0.0, %v1368
    %v1370 = vpop.f32.mrb[0].mxu0
    %1371 = vmatprep.mubr.f32.mxu0 0.0
    %1372 = vmatmul.mubr.f32.gmra.mrb[0].mxu0 %v1296
    %v1373 = vpop.f32.mrb[0].mxu0
    %v1374 = vadd.f32 0.0, %v1373
    %v1375 = vpop.f32.mrb[0].mxu0
    %1376 = vdwg.mxu0
    %vm1377 = vcmask 130048
    %v1378 = vsel %vm1377, %v788, -inf
    %1379 = vmax.xlane.f32.xlu0 %v1378
    %v1380 = vpop.xlane.xlu0 %1379
    %v1381 = vsel %vm1377, %v793, -inf
    %1382 = vmax.xlane.f32.xlu0 %v1381
    %v1383 = vpop.xlane.xlu0 %1382
    %v1384 = vsel %vm1377, %v871, -inf
    %1385 = vmax.xlane.f32.xlu0 %v1384
    %v1386 = vpop.xlane.xlu0 %1385
    %v1387 = vsel %vm1377, %v876, -inf
    %1388 = vmax.xlane.f32.xlu0 %v1387
    %v1389 = vpop.xlane.xlu0 %1388
    %v1390 = vsel %vm1377, %v954, -inf
    %1391 = vmax.xlane.f32.xlu0 %v1390
    %v1392 = vpop.xlane.xlu0 %1391
    %v1393 = vsel %vm1377, %v959, -inf
    %1394 = vmax.xlane.f32.xlu0 %v1393
    %v1395 = vpop.xlane.xlu0 %1394
    %v1396 = vsel %vm1377, %v1037, -inf
    %1397 = vmax.xlane.f32.xlu0 %v1396
    %v1398 = vpop.xlane.xlu0 %1397
    %v1399 = vsel %vm1377, %v1042, -inf
    %1400 = vmax.xlane.f32.xlu0 %v1399
    %v1401 = vpop.xlane.xlu0 %1400
    %v1402 = vsel %vm1377, %v1120, -inf
    %1403 = vmax.xlane.f32.xlu0 %v1402
    %v1404 = vpop.xlane.xlu0 %1403
    %v1405 = vsel %vm1377, %v1125, -inf
    %1406 = vmax.xlane.f32.xlu0 %v1405
    %v1407 = vpop.xlane.xlu0 %1406
    %v1408 = vsel %vm1377, %v1203, -inf
    %1409 = vmax.xlane.f32.xlu0 %v1408
    %v1410 = vpop.xlane.xlu0 %1409
    %v1411 = vsel %vm1377, %v1208, -inf
    %1412 = vmax.xlane.f32.xlu0 %v1411
    %v1413 = vpop.xlane.xlu0 %1412
    %v1414 = vsel %vm1377, %v1286, -inf
    %1415 = vmax.xlane.f32.xlu0 %v1414
    %v1416 = vpop.xlane.xlu0 %1415
    %v1417 = vsel %vm1377, %v1291, -inf
    %1418 = vmax.xlane.f32.xlu0 %v1417
    %v1419 = vpop.xlane.xlu0 %1418
    %v1420 = vsel %vm1377, %v1369, -inf
    %1421 = vmax.xlane.f32.xlu0 %v1420
    %v1422 = vpop.xlane.xlu0 %1421
    %v1423 = vsel %vm1377, %v1374, -inf
    %1424 = vmax.xlane.f32.xlu0 %v1423
    %v1425 = vpop.xlane.xlu0 %1424
    %v1426 = vsub.f32 %v788, %v1380
    %v1427 = vsub.f32 %v793, %v1383
    %v1428 = vsub.f32 %v871, %v1386
    %v1429 = vsub.f32 %v876, %v1389
    %v1430 = vsub.f32 %v954, %v1392
    %v1431 = vsub.f32 %v959, %v1395
    %v1432 = vsub.f32 %v1037, %v1398
    %v1433 = vsub.f32 %v1042, %v1401
    %v1434 = vsub.f32 %v1120, %v1404
    %v1435 = vsub.f32 %v1125, %v1407
    %v1436 = vsub.f32 %v1203, %v1410
    %v1437 = vsub.f32 %v1208, %v1413
    %v1438 = vsub.f32 %v1286, %v1416
    %v1439 = vsub.f32 %v1291, %v1419
    %v1440 = vsub.f32 %v1369, %v1422
    %v1441 = vsub.f32 %v1374, %v1425
    %v1442 = vmul.f32 %v1426, 1.442695
    %v1443 = vpow.pop %v1442
    %v1444 = vmul.f32 %v1427, 1.442695
    %v1445 = vpow.pop %v1444
    %v1446 = vmul.f32 %v1428, 1.442695
    %v1447 = vpow.pop %v1446
    %v1448 = vmul.f32 %v1429, 1.442695
    %v1449 = vpow.pop %v1448
    %v1450 = vmul.f32 %v1430, 1.442695
    %v1451 = vpow.pop %v1450
    %v1452 = vmul.f32 %v1431, 1.442695
    %v1453 = vpow.pop %v1452
    %v1454 = vmul.f32 %v1432, 1.442695
    %v1455 = vpow.pop %v1454
    %v1456 = vmul.f32 %v1433, 1.442695
    %v1457 = vpow.pop %v1456
    %v1458 = vmul.f32 %v1434, 1.442695
    %v1459 = vpow.pop %v1458
    %v1460 = vmul.f32 %v1435, 1.442695
    %v1461 = vpow.pop %v1460
    %v1462 = vmul.f32 %v1436, 1.442695
    %v1463 = vpow.pop %v1462
    %v1464 = vmul.f32 %v1437, 1.442695
    %v1465 = vpow.pop %v1464
    %v1466 = vmul.f32 %v1438, 1.442695
    %v1467 = vpow.pop %v1466
    %v1468 = vmul.f32 %v1439, 1.442695
    %v1469 = vpow.pop %v1468
    %v1470 = vmul.f32 %v1440, 1.442695
    %v1471 = vpow.pop %v1470
    %v1472 = vmul.f32 %v1441, 1.442695
    %v1473 = vpow.pop %v1472
    %v1474 = vsel %vm1377, %v1443, 0.0
    %1475 = vadd.xlane.f32.xlu0 %v1474
    %v1476 = vpop.xlane.xlu0 %1475
    %v1477 = vsel %vm1377, %v1445, 0.0
    %1478 = vadd.xlane.f32.xlu0 %v1477
    %v1479 = vpop.xlane.xlu0 %1478
    %v1480 = vsel %vm1377, %v1447, 0.0
    %1481 = vadd.xlane.f32.xlu0 %v1480
    %v1482 = vpop.xlane.xlu0 %1481
    %v1483 = vsel %vm1377, %v1449, 0.0
    %1484 = vadd.xlane.f32.xlu0 %v1483
    %v1485 = vpop.xlane.xlu0 %1484
    %v1486 = vsel %vm1377, %v1451, 0.0
    %1487 = vadd.xlane.f32.xlu0 %v1486
    %v1488 = vpop.xlane.xlu0 %1487
    %v1489 = vsel %vm1377, %v1453, 0.0
    %1490 = vadd.xlane.f32.xlu0 %v1489
    %v1491 = vpop.xlane.xlu0 %1490
    %v1492 = vsel %vm1377, %v1455, 0.0
    %1493 = vadd.xlane.f32.xlu0 %v1492
    %v1494 = vpop.xlane.xlu0 %1493
    %v1495 = vsel %vm1377, %v1457, 0.0
    %1496 = vadd.xlane.f32.xlu0 %v1495
    %v1497 = vpop.xlane.xlu0 %1496
    %v1498 = vsel %vm1377, %v1459, 0.0
    %1499 = vadd.xlane.f32.xlu0 %v1498
    %v1500 = vpop.xlane.xlu0 %1499
    %v1501 = vsel %vm1377, %v1461, 0.0
    %1502 = vadd.xlane.f32.xlu0 %v1501
    %v1503 = vpop.xlane.xlu0 %1502
    %v1504 = vsel %vm1377, %v1463, 0.0
    %1505 = vadd.xlane.f32.xlu0 %v1504
    %v1506 = vpop.xlane.xlu0 %1505
    %v1507 = vsel %vm1377, %v1465, 0.0
    %1508 = vadd.xlane.f32.xlu0 %v1507
    %v1509 = vpop.xlane.xlu0 %1508
    %v1510 = vsel %vm1377, %v1467, 0.0
    %1511 = vadd.xlane.f32.xlu0 %v1510
    %v1512 = vpop.xlane.xlu0 %1511
    %v1513 = vsel %vm1377, %v1469, 0.0
    %1514 = vadd.xlane.f32.xlu0 %v1513
    %v1515 = vpop.xlane.xlu0 %1514
    %v1516 = vsel %vm1377, %v1471, 0.0
    %1517 = vadd.xlane.f32.xlu0 %v1516
    %v1518 = vpop.xlane.xlu0 %1517
    %v1519 = vsel %vm1377, %v1473, 0.0
    %1520 = vadd.xlane.f32.xlu0 %v1519
    %v1521 = vpop.xlane.xlu0 %1520
    %v1522 = vrcp.pop %v1476
    %v1523 = vrcp.pop %v1479
    %v1524 = vrcp.pop %v1482
    %v1525 = vrcp.pop %v1485
    %v1526 = vrcp.pop %v1488
    %v1527 = vrcp.pop %v1491
    %v1528 = vrcp.pop %v1494
    %v1529 = vrcp.pop %v1497
    %v1530 = vrcp.pop %v1500
    %v1531 = vrcp.pop %v1503
    %v1532 = vrcp.pop %v1506
    %v1533 = vrcp.pop %v1509
    %v1534 = vrcp.pop %v1512
    %v1535 = vrcp.pop %v1515
    %v1536 = vrcp.pop %v1518
    %v1537 = vrcp.pop %v1521
    %v1538 = vmul.f32 %v1443, %v1522
    %v1539 = vmul.f32 %v1445, %v1523
    %v1540 = vmul.f32 %v1447, %v1524
    %v1541 = vmul.f32 %v1449, %v1525
    %v1542 = vmul.f32 %v1451, %v1526
    %v1543 = vmul.f32 %v1453, %v1527
    %v1544 = vmul.f32 %v1455, %v1528
    %v1545 = vmul.f32 %v1457, %v1529
    %v1546 = vmul.f32 %v1459, %v1530
    %v1547 = vmul.f32 %v1461, %v1531
    %v1548 = vmul.f32 %v1463, %v1532
    %v1549 = vmul.f32 %v1465, %v1533
    %v1550 = vmul.f32 %v1467, %v1534
    %v1551 = vmul.f32 %v1469, %v1535
    %v1552 = vmul.f32 %v1471, %v1536
    %v1553 = vmul.f32 %v1473, %v1537
    %v1555 = vsel %vm1377, %v1538, 0
    %v1558 = vsel %vm1377, %v1539, 0
    %1560 = vmatprep.subr.mxu0 0.0
    %1561 = vmatpush1.msra.mxu0 %v598
    %1562 = vmatprep.subr.mxu0 0.0
    %1563 = vmatpush1.msra.mxu0 %v603
    %1564 = vmatprep.subr.mxu0 0.0
    %1565 = vmatpush1.msra.mxu0 0.0
    %1566 = vmatprep.subr.mxu0 0.0
    %1567 = vmatpush1.msra.mxu0 0.0
    %1568 = vmatprep.subr.mxu0 0.0
    %1569 = vmatpush1.msra.mxu0 0.0
    %1570 = vmatprep.subr.mxu0 0.0
    %1571 = vmatpush1.msra.mxu0 0.0
    %1572 = vmatprep.subr.mxu0 0.0
    %1573 = vmatpush1.msra.mxu0 0.0
    %1574 = vmatprep.subr.mxu0 0.0
    %1575 = vmatpush1.msra.mxu0 0.0
    %1576 = vmatprep.subr.mxu0 0.0
    %1577 = vmatpush1.msra.mxu0 0.0
    %1578 = vmatprep.subr.mxu0 0.0
    %1579 = vmatpush1.msra.mxu0 0.0
    %1580 = vmatprep.subr.mxu0 0.0
    %1581 = vmatpush1.msra.mxu0 0.0
    %1582 = vmatprep.subr.mxu0 0.0
    %1583 = vmatpush1.msra.mxu0 0.0
    %1584 = vmatprep.subr.mxu0 0.0
    %1585 = vmatpush1.msra.mxu0 0.0
    %1586 = vmatprep.subr.mxu0 0.0
    %1587 = vmatpush1.msra.mxu0 0.0
    %1588 = vmatprep.subr.mxu0 0.0
    %1589 = vmatpush1.msra.mxu0 0.0
    %1590 = vmatprep.subr.mxu0 0.0
    %1591 = vmatpush1.msra.mxu0 0.0
    %1592 = vmatprep.subr.mxu0 0.0
    %1593 = vmatpush1.msra.mxu0 0.0
    %1594 = vmatprep.subr.mxu0 0.0
    %1595 = vmatpush1.msra.mxu0 0.0
    %1596 = vmatprep.subr.mxu0 0.0
    %1597 = vmatpush1.msra.mxu0 0.0
    %1598 = vmatprep.subr.mxu0 0.0
    %1599 = vmatpush1.msra.mxu0 0.0
    %1600 = vmatprep.subr.mxu0 0.0
    %1601 = vmatpush1.msra.mxu0 0.0
    %1602 = vmatprep.subr.mxu0 0.0
    %1603 = vmatpush1.msra.mxu0 0.0
    %1604 = vmatprep.subr.mxu0 0.0
    %1605 = vmatpush1.msra.mxu0 0.0
    %1606 = vmatprep.subr.mxu0 0.0
    %1607 = vmatpush1.msra.mxu0 0.0
    %1608 = vmatprep.subr.mxu0 0.0
    %1609 = vmatpush1.msra.mxu0 0.0
    %1610 = vmatprep.subr.mxu0 0.0
    %1611 = vmatpush1.msra.mxu0 0.0
    %1612 = vmatprep.subr.mxu0 0.0
    %1613 = vmatpush1.msra.mxu0 0.0
    %1614 = vmatprep.subr.mxu0 0.0
    %1615 = vmatpush1.msra.mxu0 0.0
    %1616 = vmatprep.subr.mxu0 0.0
    %1617 = vmatpush1.msra.mxu0 0.0
    %1618 = vmatprep.subr.mxu0 0.0
    %1619 = vmatpush1.msra.mxu0 0.0
    %1620 = vmatprep.subr.mxu0 0.0
    %1621 = vmatpush1.msra.mxu0 0.0
    %1622 = vmatprep.subr.mxu0 0.0
    %1623 = vmatpush1.msra.mxu0 0.0
    %1624 = vmatprep.mubr.f32.mxu0 0.0
    %1625 = vmatmul.mubr.f32.gmra.mrb[0].mxu0 %v1555
    %v1626 = vpop.f32.mrb[0].mxu0
    %v1627 = vadd.f32 0.0, %v1626
    %v1628 = vpop.f32.mrb[0].mxu0
    %1629 = vmatprep.mubr.f32.mxu0 0.0
    %1630 = vmatmul.mubr.f32.gmra.mrb[0].mxu0 %v1558
    %v1631 = vpop.f32.mrb[0].mxu0
    %v1632 = vadd.f32 0.0, %v1631
    %v1633 = vpop.f32.mrb[0].mxu0
    %1634 = vdwg.mxu0
    %v1636 = vsel %vm1377, %v1540, 0
    %v1639 = vsel %vm1377, %v1541, 0
    %1641 = vmatprep.subr.mxu0 0.0
    %1642 = vmatpush1.msra.mxu0 %v608
    %1643 = vmatprep.subr.mxu0 0.0
    %1644 = vmatpush1.msra.mxu0 %v613
    %1645 = vmatprep.subr.mxu0 0.0
    %1646 = vmatpush1.msra.mxu0 0.0
    %1647 = vmatprep.subr.mxu0 0.0
    %1648 = vmatpush1.msra.mxu0 0.0
    %1649 = vmatprep.subr.mxu0 0.0
    %1650 = vmatpush1.msra.mxu0 0.0
    %1651 = vmatprep.subr.mxu0 0.0
    %1652 = vmatpush1.msra.mxu0 0.0
    %1653 = vmatprep.subr.mxu0 0.0
    %1654 = vmatpush1.msra.mxu0 0.0
    %1655 = vmatprep.subr.mxu0 0.0
    %1656 = vmatpush1.msra.mxu0 0.0
    %1657 = vmatprep.subr.mxu0 0.0
    %1658 = vmatpush1.msra.mxu0 0.0
    %1659 = vmatprep.subr.mxu0 0.0
    %1660 = vmatpush1.msra.mxu0 0.0
    %1661 = vmatprep.subr.mxu0 0.0
    %1662 = vmatpush1.msra.mxu0 0.0
    %1663 = vmatprep.subr.mxu0 0.0
    %1664 = vmatpush1.msra.mxu0 0.0
    %1665 = vmatprep.subr.mxu0 0.0
    %1666 = vmatpush1.msra.mxu0 0.0
    %1667 = vmatprep.subr.mxu0 0.0
    %1668 = vmatpush1.msra.mxu0 0.0
    %1669 = vmatprep.subr.mxu0 0.0
    %1670 = vmatpush1.msra.mxu0 0.0
    %1671 = vmatprep.subr.mxu0 0.0
    %1672 = vmatpush1.msra.mxu0 0.0
    %1673 = vmatprep.subr.mxu0 0.0
    %1674 = vmatpush1.msra.mxu0 0.0
    %1675 = vmatprep.subr.mxu0 0.0
    %1676 = vmatpush1.msra.mxu0 0.0
    %1677 = vmatprep.subr.mxu0 0.0
    %1678 = vmatpush1.msra.mxu0 0.0
    %1679 = vmatprep.subr.mxu0 0.0
    %1680 = vmatpush1.msra.mxu0 0.0
    %1681 = vmatprep.subr.mxu0 0.0
    %1682 = vmatpush1.msra.mxu0 0.0
    %1683 = vmatprep.subr.mxu0 0.0
    %1684 = vmatpush1.msra.mxu0 0.0
    %1685 = vmatprep.subr.mxu0 0.0
    %1686 = vmatpush1.msra.mxu0 0.0
    %1687 = vmatprep.subr.mxu0 0.0
    %1688 = vmatpush1.msra.mxu0 0.0
    %1689 = vmatprep.subr.mxu0 0.0
    %1690 = vmatpush1.msra.mxu0 0.0
    %1691 = vmatprep.subr.mxu0 0.0
    %1692 = vmatpush1.msra.mxu0 0.0
    %1693 = vmatprep.subr.mxu0 0.0
    %1694 = vmatpush1.msra.mxu0 0.0
    %1695 = vmatprep.subr.mxu0 0.0
    %1696 = vmatpush1.msra.mxu0 0.0
    %1697 = vmatprep.subr.mxu0 0.0
    %1698 = vmatpush1.msra.mxu0 0.0
    %1699 = vmatprep.subr.mxu0 0.0
    %1700 = vmatpush1.msra.mxu0 0.0
    %1701 = vmatprep.subr.mxu0 0.0
    %1702 = vmatpush1.msra.mxu0 0.0
    %1703 = vmatprep.subr.mxu0 0.0
    %1704 = vmatpush1.msra.mxu0 0.0
    %1705 = vmatprep.mubr.f32.mxu0 0.0
    %1706 = vmatmul.mubr.f32.gmra.mrb[0].mxu0 %v1636
    %v1707 = vpop.f32.mrb[0].mxu0
    %v1708 = vadd.f32 0.0, %v1707
    %v1709 = vpop.f32.mrb[0].mxu0
    %1710 = vmatprep.mubr.f32.mxu0 0.0
    %1711 = vmatmul.mubr.f32.gmra.mrb[0].mxu0 %v1639
    %v1712 = vpop.f32.mrb[0].mxu0
    %v1713 = vadd.f32 0.0, %v1712
    %v1714 = vpop.f32.mrb[0].mxu0
    %1715 = vdwg.mxu0
    %v1717 = vsel %vm1377, %v1542, 0
    %v1720 = vsel %vm1377, %v1543, 0
    %1722 = vmatprep.subr.mxu0 0.0
    %1723 = vmatpush1.msra.mxu0 %v677
    %1724 = vmatprep.subr.mxu0 0.0
    %1725 = vmatpush1.msra.mxu0 %v679
    %1726 = vmatprep.subr.mxu0 0.0
    %1727 = vmatpush1.msra.mxu0 0.0
    %1728 = vmatprep.subr.mxu0 0.0
    %1729 = vmatpush1.msra.mxu0 0.0
    %1730 = vmatprep.subr.mxu0 0.0
    %1731 = vmatpush1.msra.mxu0 0.0
    %1732 = vmatprep.subr.mxu0 0.0
    %1733 = vmatpush1.msra.mxu0 0.0
    %1734 = vmatprep.subr.mxu0 0.0
    %1735 = vmatpush1.msra.mxu0 0.0
    %1736 = vmatprep.subr.mxu0 0.0
    %1737 = vmatpush1.msra.mxu0 0.0
    %1738 = vmatprep.subr.mxu0 0.0
    %1739 = vmatpush1.msra.mxu0 0.0
    %1740 = vmatprep.subr.mxu0 0.0
    %1741 = vmatpush1.msra.mxu0 0.0
    %1742 = vmatprep.subr.mxu0 0.0
    %1743 = vmatpush1.msra.mxu0 0.0
    %1744 = vmatprep.subr.mxu0 0.0
    %1745 = vmatpush1.msra.mxu0 0.0
    %1746 = vmatprep.subr.mxu0 0.0
    %1747 = vmatpush1.msra.mxu0 0.0
    %1748 = vmatprep.subr.mxu0 0.0
    %1749 = vmatpush1.msra.mxu0 0.0
    %1750 = vmatprep.subr.mxu0 0.0
    %1751 = vmatpush1.msra.mxu0 0.0
    %1752 = vmatprep.subr.mxu0 0.0
    %1753 = vmatpush1.msra.mxu0 0.0
    %1754 = vmatprep.subr.mxu0 0.0
    %1755 = vmatpush1.msra.mxu0 0.0
    %1756 = vmatprep.subr.mxu0 0.0
    %1757 = vmatpush1.msra.mxu0 0.0
    %1758 = vmatprep.subr.mxu0 0.0
    %1759 = vmatpush1.msra.mxu0 0.0
    %1760 = vmatprep.subr.mxu0 0.0
    %1761 = vmatpush1.msra.mxu0 0.0
    %1762 = vmatprep.subr.mxu0 0.0
    %1763 = vmatpush1.msra.mxu0 0.0
    %1764 = vmatprep.subr.mxu0 0.0
    %1765 = vmatpush1.msra.mxu0 0.0
    %1766 = vmatprep.subr.mxu0 0.0
    %1767 = vmatpush1.msra.mxu0 0.0
    %1768 = vmatprep.subr.mxu0 0.0
    %1769 = vmatpush1.msra.mxu0 0.0
    %1770 = vmatprep.subr.mxu0 0.0
    %1771 = vmatpush1.msra.mxu0 0.0
    %1772 = vmatprep.subr.mxu0 0.0
    %1773 = vmatpush1.msra.mxu0 0.0
    %1774 = vmatprep.subr.mxu0 0.0
    %1775 = vmatpush1.msra.mxu0 0.0
    %1776 = vmatprep.subr.mxu0 0.0
    %1777 = vmatpush1.msra.mxu0 0.0
    %1778 = vmatprep.subr.mxu0 0.0
    %1779 = vmatpush1.msra.mxu0 0.0
    %1780 = vmatprep.subr.mxu0 0.0
    %1781 = vmatpush1.msra.mxu0 0.0
    %1782 = vmatprep.subr.mxu0 0.0
    %1783 = vmatpush1.msra.mxu0 0.0
    %1784 = vmatprep.subr.mxu0 0.0
    %1785 = vmatpush1.msra.mxu0 0.0
    %1786 = vmatprep.mubr.f32.mxu0 0.0
    %1787 = vmatmul.mubr.f32.gmra.mrb[0].mxu0 %v1717
    %v1788 = vpop.f32.mrb[0].mxu0
    %v1789 = vadd.f32 0.0, %v1788
    %v1790 = vpop.f32.mrb[0].mxu0
    %1791 = vmatprep.mubr.f32.mxu0 0.0
    %1792 = vmatmul.mubr.f32.gmra.mrb[0].mxu0 %v1720
    %v1793 = vpop.f32.mrb[0].mxu0
    %v1794 = vadd.f32 0.0, %v1793
    %v1795 = vpop.f32.mrb[0].mxu0
    %1796 = vdwg.mxu0
    %v1798 = vsel %vm1377, %v1544, 0
    %v1801 = vsel %vm1377, %v1545, 0
    %1803 = vmatprep.subr.mxu0 0.0
    %1804 = vmatpush1.msra.mxu0 %v681
    %1805 = vmatprep.subr.mxu0 0.0
    %1806 = vmatpush1.msra.mxu0 %v683
    %1807 = vmatprep.subr.mxu0 0.0
    %1808 = vmatpush1.msra.mxu0 0.0
    %1809 = vmatprep.subr.mxu0 0.0
    %1810 = vmatpush1.msra.mxu0 0.0
    %1811 = vmatprep.subr.mxu0 0.0
    %1812 = vmatpush1.msra.mxu0 0.0
    %1813 = vmatprep.subr.mxu0 0.0
    %1814 = vmatpush1.msra.mxu0 0.0
    %1815 = vmatprep.subr.mxu0 0.0
    %1816 = vmatpush1.msra.mxu0 0.0
    %1817 = vmatprep.subr.mxu0 0.0
    %1818 = vmatpush1.msra.mxu0 0.0
    %1819 = vmatprep.subr.mxu0 0.0
    %1820 = vmatpush1.msra.mxu0 0.0
    %1821 = vmatprep.subr.mxu0 0.0
    %1822 = vmatpush1.msra.mxu0 0.0
    %1823 = vmatprep.subr.mxu0 0.0
    %1824 = vmatpush1.msra.mxu0 0.0
    %1825 = vmatprep.subr.mxu0 0.0
    %1826 = vmatpush1.msra.mxu0 0.0
    %1827 = vmatprep.subr.mxu0 0.0
    %1828 = vmatpush1.msra.mxu0 0.0
    %1829 = vmatprep.subr.mxu0 0.0
    %1830 = vmatpush1.msra.mxu0 0.0
    %1831 = vmatprep.subr.mxu0 0.0
    %1832 = vmatpush1.msra.mxu0 0.0
    %1833 = vmatprep.subr.mxu0 0.0
    %1834 = vmatpush1.msra.mxu0 0.0
    %1835 = vmatprep.subr.mxu0 0.0
    %1836 = vmatpush1.msra.mxu0 0.0
    %1837 = vmatprep.subr.mxu0 0.0
    %1838 = vmatpush1.msra.mxu0 0.0
    %1839 = vmatprep.subr.mxu0 0.0
    %1840 = vmatpush1.msra.mxu0 0.0
    %1841 = vmatprep.subr.mxu0 0.0
    %1842 = vmatpush1.msra.mxu0 0.0
    %1843 = vmatprep.subr.mxu0 0.0
    %1844 = vmatpush1.msra.mxu0 0.0
    %1845 = vmatprep.subr.mxu0 0.0
    %1846 = vmatpush1.msra.mxu0 0.0
    %1847 = vmatprep.subr.mxu0 0.0
    %1848 = vmatpush1.msra.mxu0 0.0
    %1849 = vmatprep.subr.mxu0 0.0
    %1850 = vmatpush1.msra.mxu0 0.0
    %1851 = vmatprep.subr.mxu0 0.0
    %1852 = vmatpush1.msra.mxu0 0.0
    %1853 = vmatprep.subr.mxu0 0.0
    %1854 = vmatpush1.msra.mxu0 0.0
    %1855 = vmatprep.subr.mxu0 0.0
    %1856 = vmatpush1.msra.mxu0 0.0
    %1857 = vmatprep.subr.mxu0 0.0
    %1858 = vmatpush1.msra.mxu0 0.0
    %1859 = vmatprep.subr.mxu0 0.0
    %1860 = vmatpush1.msra.mxu0 0.0
    %1861 = vmatprep.subr.mxu0 0.0
    %1862 = vmatpush1.msra.mxu0 0.0
    %1863 = vmatprep.subr.mxu0 0.0
    %1864 = vmatpush1.msra.mxu0 0.0
    %1865 = vmatprep.subr.mxu0 0.0
    %1866 = vmatpush1.msra.mxu0 0.0
    %1867 = vmatprep.mubr.f32.mxu0 0.0
    %1868 = vmatmul.mubr.f32.gmra.mrb[0].mxu0 %v1798
    %v1869 = vpop.f32.mrb[0].mxu0
    %v1870 = vadd.f32 0.0, %v1869
    %v1871 = vpop.f32.mrb[0].mxu0
    %1872 = vmatprep.mubr.f32.mxu0 0.0
    %1873 = vmatmul.mubr.f32.gmra.mrb[0].mxu0 %v1801
    %v1874 = vpop.f32.mrb[0].mxu0
    %v1875 = vadd.f32 0.0, %v1874
    %v1876 = vpop.f32.mrb[0].mxu0
    %1877 = vdwg.mxu0
    %v1879 = vsel %vm1377, %v1546, 0
    %v1882 = vsel %vm1377, %v1547, 0
    %1884 = vmatprep.subr.mxu0 0.0
    %1885 = vmatpush1.msra.mxu0 %v689
    %1886 = vmatprep.subr.mxu0 0.0
    %1887 = vmatpush1.msra.mxu0 %v691
    %1888 = vmatprep.subr.mxu0 0.0
    %1889 = vmatpush1.msra.mxu0 0.0
    %1890 = vmatprep.subr.mxu0 0.0
    %1891 = vmatpush1.msra.mxu0 0.0
    %1892 = vmatprep.subr.mxu0 0.0
    %1893 = vmatpush1.msra.mxu0 0.0
    %1894 = vmatprep.subr.mxu0 0.0
    %1895 = vmatpush1.msra.mxu0 0.0
    %1896 = vmatprep.subr.mxu0 0.0
    %1897 = vmatpush1.msra.mxu0 0.0
    %1898 = vmatprep.subr.mxu0 0.0
    %1899 = vmatpush1.msra.mxu0 0.0
    %1900 = vmatprep.subr.mxu0 0.0
    %1901 = vmatpush1.msra.mxu0 0.0
    %1902 = vmatprep.subr.mxu0 0.0
    %1903 = vmatpush1.msra.mxu0 0.0
    %1904 = vmatprep.subr.mxu0 0.0
    %1905 = vmatpush1.msra.mxu0 0.0
    %1906 = vmatprep.subr.mxu0 0.0
    %1907 = vmatpush1.msra.mxu0 0.0
    %1908 = vmatprep.subr.mxu0 0.0
    %1909 = vmatpush1.msra.mxu0 0.0
    %1910 = vmatprep.subr.mxu0 0.0
    %1911 = vmatpush1.msra.mxu0 0.0
    %1912 = vmatprep.subr.mxu0 0.0
    %1913 = vmatpush1.msra.mxu0 0.0
    %1914 = vmatprep.subr.mxu0 0.0
    %1915 = vmatpush1.msra.mxu0 0.0
    %1916 = vmatprep.subr.mxu0 0.0
    %1917 = vmatpush1.msra.mxu0 0.0
    %1918 = vmatprep.subr.mxu0 0.0
    %1919 = vmatpush1.msra.mxu0 0.0
    %1920 = vmatprep.subr.mxu0 0.0
    %1921 = vmatpush1.msra.mxu0 0.0
    %1922 = vmatprep.subr.mxu0 0.0
    %1923 = vmatpush1.msra.mxu0 0.0
    %1924 = vmatprep.subr.mxu0 0.0
    %1925 = vmatpush1.msra.mxu0 0.0
    %1926 = vmatprep.subr.mxu0 0.0
    %1927 = vmatpush1.msra.mxu0 0.0
    %1928 = vmatprep.subr.mxu0 0.0
    %1929 = vmatpush1.msra.mxu0 0.0
    %1930 = vmatprep.subr.mxu0 0.0
    %1931 = vmatpush1.msra.mxu0 0.0
    %1932 = vmatprep.subr.mxu0 0.0
    %1933 = vmatpush1.msra.mxu0 0.0
    %1934 = vmatprep.subr.mxu0 0.0
    %1935 = vmatpush1.msra.mxu0 0.0
    %1936 = vmatprep.subr.mxu0 0.0
    %1937 = vmatpush1.msra.mxu0 0.0
    %1938 = vmatprep.subr.mxu0 0.0
    %1939 = vmatpush1.msra.mxu0 0.0
    %1940 = vmatprep.subr.mxu0 0.0
    %1941 = vmatpush1.msra.mxu0 0.0
    %1942 = vmatprep.subr.mxu0 0.0
    %1943 = vmatpush1.msra.mxu0 0.0
    %1944 = vmatprep.subr.mxu0 0.0
    %1945 = vmatpush1.msra.mxu0 0.0
    %1946 = vmatprep.subr.mxu0 0.0
    %1947 = vmatpush1.msra.mxu0 0.0
    %1948 = vmatprep.mubr.f32.mxu0 0.0
    %1949 = vmatmul.mubr.f32.gmra.mrb[0].mxu0 %v1879
    %v1950 = vpop.f32.mrb[0].mxu0
    %v1951 = vadd.f32 0.0, %v1950
    %v1952 = vpop.f32.mrb[0].mxu0
    %1953 = vmatprep.mubr.f32.mxu0 0.0
    %1954 = vmatmul.mubr.f32.gmra.mrb[0].mxu0 %v1882
    %v1955 = vpop.f32.mrb[0].mxu0
    %v1956 = vadd.f32 0.0, %v1955
    %v1957 = vpop.f32.mrb[0].mxu0
    %1958 = vdwg.mxu0
    %v1960 = vsel %vm1377, %v1548, 0
    %v1963 = vsel %vm1377, %v1549, 0
    %1965 = vmatprep.subr.mxu0 0.0
    %1966 = vmatpush1.msra.mxu0 %v693
    %1967 = vmatprep.subr.mxu0 0.0
    %1968 = vmatpush1.msra.mxu0 %v695
    %1969 = vmatprep.subr.mxu0 0.0
    %1970 = vmatpush1.msra.mxu0 0.0
    %1971 = vmatprep.subr.mxu0 0.0
    %1972 = vmatpush1.msra.mxu0 0.0
    %1973 = vmatprep.subr.mxu0 0.0
    %1974 = vmatpush1.msra.mxu0 0.0
    %1975 = vmatprep.subr.mxu0 0.0
    %1976 = vmatpush1.msra.mxu0 0.0
    %1977 = vmatprep.subr.mxu0 0.0
    %1978 = vmatpush1.msra.mxu0 0.0
    %1979 = vmatprep.subr.mxu0 0.0
    %1980 = vmatpush1.msra.mxu0 0.0
    %1981 = vmatprep.subr.mxu0 0.0
    %1982 = vmatpush1.msra.mxu0 0.0
    %1983 = vmatprep.subr.mxu0 0.0
    %1984 = vmatpush1.msra.mxu0 0.0
    %1985 = vmatprep.subr.mxu0 0.0
    %1986 = vmatpush1.msra.mxu0 0.0
    %1987 = vmatprep.subr.mxu0 0.0
    %1988 = vmatpush1.msra.mxu0 0.0
    %1989 = vmatprep.subr.mxu0 0.0
    %1990 = vmatpush1.msra.mxu0 0.0
    %1991 = vmatprep.subr.mxu0 0.0
    %1992 = vmatpush1.msra.mxu0 0.0
    %1993 = vmatprep.subr.mxu0 0.0
    %1994 = vmatpush1.msra.mxu0 0.0
    %1995 = vmatprep.subr.mxu0 0.0
    %1996 = vmatpush1.msra.mxu0 0.0
    %1997 = vmatprep.subr.mxu0 0.0
    %1998 = vmatpush1.msra.mxu0 0.0
    %1999 = vmatprep.subr.mxu0 0.0
    %2000 = vmatpush1.msra.mxu0 0.0
    %2001 = vmatprep.subr.mxu0 0.0
    %2002 = vmatpush1.msra.mxu0 0.0
    %2003 = vmatprep.subr.mxu0 0.0
    %2004 = vmatpush1.msra.mxu0 0.0
    %2005 = vmatprep.subr.mxu0 0.0
    %2006 = vmatpush1.msra.mxu0 0.0
    %2007 = vmatprep.subr.mxu0 0.0
    %2008 = vmatpush1.msra.mxu0 0.0
    %2009 = vmatprep.subr.mxu0 0.0
    %2010 = vmatpush1.msra.mxu0 0.0
    %2011 = vmatprep.subr.mxu0 0.0
    %2012 = vmatpush1.msra.mxu0 0.0
    %2013 = vmatprep.subr.mxu0 0.0
    %2014 = vmatpush1.msra.mxu0 0.0
    %2015 = vmatprep.subr.mxu0 0.0
    %2016 = vmatpush1.msra.mxu0 0.0
    %2017 = vmatprep.subr.mxu0 0.0
    %2018 = vmatpush1.msra.mxu0 0.0
    %2019 = vmatprep.subr.mxu0 0.0
    %2020 = vmatpush1.msra.mxu0 0.0
    %2021 = vmatprep.subr.mxu0 0.0
    %2022 = vmatpush1.msra.mxu0 0.0
    %2023 = vmatprep.subr.mxu0 0.0
    %2024 = vmatpush1.msra.mxu0 0.0
    %2025 = vmatprep.subr.mxu0 0.0
    %2026 = vmatpush1.msra.mxu0 0.0
    %2027 = vmatprep.subr.mxu0 0.0
    %2028 = vmatpush1.msra.mxu0 0.0
    %2029 = vmatprep.mubr.f32.mxu0 0.0
    %2030 = vmatmul.mubr.f32.gmra.mrb[0].mxu0 %v1960
    %v2031 = vpop.f32.mrb[0].mxu0
    %v2032 = vadd.f32 0.0, %v2031
    %v2033 = vpop.f32.mrb[0].mxu0
    %2034 = vmatprep.mubr.f32.mxu0 0.0
    %2035 = vmatmul.mubr.f32.gmra.mrb[0].mxu0 %v1963
    %v2036 = vpop.f32.mrb[0].mxu0
    %v2037 = vadd.f32 0.0, %v2036
    %v2038 = vpop.f32.mrb[0].mxu0
    %2039 = vdwg.mxu0
    %v2041 = vsel %vm1377, %v1550, 0
    %v2044 = vsel %vm1377, %v1551, 0
    %2046 = vmatprep.subr.mxu0 0.0
    %2047 = vmatpush1.msra.mxu0 %v701
    %2048 = vmatprep.subr.mxu0 0.0
    %2049 = vmatpush1.msra.mxu0 %v703
    %2050 = vmatprep.subr.mxu0 0.0
    %2051 = vmatpush1.msra.mxu0 0.0
    %2052 = vmatprep.subr.mxu0 0.0
    %2053 = vmatpush1.msra.mxu0 0.0
    %2054 = vmatprep.subr.mxu0 0.0
    %2055 = vmatpush1.msra.mxu0 0.0
    %2056 = vmatprep.subr.mxu0 0.0
    %2057 = vmatpush1.msra.mxu0 0.0
    %2058 = vmatprep.subr.mxu0 0.0
    %2059 = vmatpush1.msra.mxu0 0.0
    %2060 = vmatprep.subr.mxu0 0.0
    %2061 = vmatpush1.msra.mxu0 0.0
    %2062 = vmatprep.subr.mxu0 0.0
    %2063 = vmatpush1.msra.mxu0 0.0
    %2064 = vmatprep.subr.mxu0 0.0
    %2065 = vmatpush1.msra.mxu0 0.0
    %2066 = vmatprep.subr.mxu0 0.0
    %2067 = vmatpush1.msra.mxu0 0.0
    %2068 = vmatprep.subr.mxu0 0.0
    %2069 = vmatpush1.msra.mxu0 0.0
    %2070 = vmatprep.subr.mxu0 0.0
    %2071 = vmatpush1.msra.mxu0 0.0
    %2072 = vmatprep.subr.mxu0 0.0
    %2073 = vmatpush1.msra.mxu0 0.0
    %2074 = vmatprep.subr.mxu0 0.0
    %2075 = vmatpush1.msra.mxu0 0.0
    %2076 = vmatprep.subr.mxu0 0.0
    %2077 = vmatpush1.msra.mxu0 0.0
    %2078 = vmatprep.subr.mxu0 0.0
    %2079 = vmatpush1.msra.mxu0 0.0
    %2080 = vmatprep.subr.mxu0 0.0
    %2081 = vmatpush1.msra.mxu0 0.0
    %2082 = vmatprep.subr.mxu0 0.0
    %2083 = vmatpush1.msra.mxu0 0.0
    %2084 = vmatprep.subr.mxu0 0.0
    %2085 = vmatpush1.msra.mxu0 0.0
    %2086 = vmatprep.subr.mxu0 0.0
    %2087 = vmatpush1.msra.mxu0 0.0
    %2088 = vmatprep.subr.mxu0 0.0
    %2089 = vmatpush1.msra.mxu0 0.0
    %2090 = vmatprep.subr.mxu0 0.0
    %2091 = vmatpush1.msra.mxu0 0.0
    %2092 = vmatprep.subr.mxu0 0.0
    %2093 = vmatpush1.msra.mxu0 0.0
    %2094 = vmatprep.subr.mxu0 0.0
    %2095 = vmatpush1.msra.mxu0 0.0
    %2096 = vmatprep.subr.mxu0 0.0
    %2097 = vmatpush1.msra.mxu0 0.0
    %2098 = vmatprep.subr.mxu0 0.0
    %2099 = vmatpush1.msra.mxu0 0.0
    %2100 = vmatprep.subr.mxu0 0.0
    %2101 = vmatpush1.msra.mxu0 0.0
    %2102 = vmatprep.subr.mxu0 0.0
    %2103 = vmatpush1.msra.mxu0 0.0
    %2104 = vmatprep.subr.mxu0 0.0
    %2105 = vmatpush1.msra.mxu0 0.0
    %2106 = vmatprep.subr.mxu0 0.0
    %2107 = vmatpush1.msra.mxu0 0.0
    %2108 = vmatprep.subr.mxu0 0.0
    %2109 = vmatpush1.msra.mxu0 0.0
    %2110 = vmatprep.mubr.f32.mxu0 0.0
    %2111 = vmatmul.mubr.f32.gmra.mrb[0].mxu0 %v2041
    %v2112 = vpop.f32.mrb[0].mxu0
    %v2113 = vadd.f32 0.0, %v2112
    %v2114 = vpop.f32.mrb[0].mxu0
    %2115 = vmatprep.mubr.f32.mxu0 0.0
    %2116 = vmatmul.mubr.f32.gmra.mrb[0].mxu0 %v2044
    %v2117 = vpop.f32.mrb[0].mxu0
    %v2118 = vadd.f32 0.0, %v2117
    %v2119 = vpop.f32.mrb[0].mxu0
    %2120 = vdwg.mxu0
    %v2122 = vsel %vm1377, %v1552, 0
    %v2125 = vsel %vm1377, %v1553, 0
    %2127 = vmatprep.subr.mxu0 0.0
    %2128 = vmatpush1.msra.mxu0 %v705
    %2129 = vmatprep.subr.mxu0 0.0
    %2130 = vmatpush1.msra.mxu0 %v707
    %2131 = vmatprep.subr.mxu0 0.0
    %2132 = vmatpush1.msra.mxu0 0.0
    %2133 = vmatprep.subr.mxu0 0.0
    %2134 = vmatpush1.msra.mxu0 0.0
    %2135 = vmatprep.subr.mxu0 0.0
    %2136 = vmatpush1.msra.mxu0 0.0
    %2137 = vmatprep.subr.mxu0 0.0
    %2138 = vmatpush1.msra.mxu0 0.0
    %2139 = vmatprep.subr.mxu0 0.0
    %2140 = vmatpush1.msra.mxu0 0.0
    %2141 = vmatprep.subr.mxu0 0.0
    %2142 = vmatpush1.msra.mxu0 0.0
    %2143 = vmatprep.subr.mxu0 0.0
    %2144 = vmatpush1.msra.mxu0 0.0
    %2145 = vmatprep.subr.mxu0 0.0
    %2146 = vmatpush1.msra.mxu0 0.0
    %2147 = vmatprep.subr.mxu0 0.0
    %2148 = vmatpush1.msra.mxu0 0.0
    %2149 = vmatprep.subr.mxu0 0.0
    %2150 = vmatpush1.msra.mxu0 0.0
    %2151 = vmatprep.subr.mxu0 0.0
    %2152 = vmatpush1.msra.mxu0 0.0
    %2153 = vmatprep.subr.mxu0 0.0
    %2154 = vmatpush1.msra.mxu0 0.0
    %2155 = vmatprep.subr.mxu0 0.0
    %2156 = vmatpush1.msra.mxu0 0.0
    %2157 = vmatprep.subr.mxu0 0.0
    %2158 = vmatpush1.msra.mxu0 0.0
    %2159 = vmatprep.subr.mxu0 0.0
    %2160 = vmatpush1.msra.mxu0 0.0
    %2161 = vmatprep.subr.mxu0 0.0
    %2162 = vmatpush1.msra.mxu0 0.0
    %2163 = vmatprep.subr.mxu0 0.0
    %2164 = vmatpush1.msra.mxu0 0.0
    %2165 = vmatprep.subr.mxu0 0.0
    %2166 = vmatpush1.msra.mxu0 0.0
    %2167 = vmatprep.subr.mxu0 0.0
    %2168 = vmatpush1.msra.mxu0 0.0
    %2169 = vmatprep.subr.mxu0 0.0
    %2170 = vmatpush1.msra.mxu0 0.0
    %2171 = vmatprep.subr.mxu0 0.0
    %2172 = vmatpush1.msra.mxu0 0.0
    %2173 = vmatprep.subr.mxu0 0.0
    %2174 = vmatpush1.msra.mxu0 0.0
    %2175 = vmatprep.subr.mxu0 0.0
    %2176 = vmatpush1.msra.mxu0 0.0
    %2177 = vmatprep.subr.mxu0 0.0
    %2178 = vmatpush1.msra.mxu0 0.0
    %2179 = vmatprep.subr.mxu0 0.0
    %2180 = vmatpush1.msra.mxu0 0.0
    %2181 = vmatprep.subr.mxu0 0.0
    %2182 = vmatpush1.msra.mxu0 0.0
    %2183 = vmatprep.subr.mxu0 0.0
    %2184 = vmatpush1.msra.mxu0 0.0
    %2185 = vmatprep.subr.mxu0 0.0
    %2186 = vmatpush1.msra.mxu0 0.0
    %2187 = vmatprep.subr.mxu0 0.0
    %2188 = vmatpush1.msra.mxu0 0.0
    %2189 = vmatprep.subr.mxu0 0.0
    %2190 = vmatpush1.msra.mxu0 0.0
    %2191 = vmatprep.mubr.f32.mxu0 0.0
    %2192 = vmatmul.mubr.f32.gmra.mrb[0].mxu0 %v2122
    %v2193 = vpop.f32.mrb[0].mxu0
    %v2194 = vadd.f32 0.0, %v2193
    %v2195 = vpop.f32.mrb[0].mxu0
    %2196 = vmatprep.mubr.f32.mxu0 0.0
    %2197 = vmatmul.mubr.f32.gmra.mrb[0].mxu0 %v2125
    %v2198 = vpop.f32.mrb[0].mxu0
    %v2199 = vadd.f32 0.0, %v2198
    %v2200 = vpop.f32.mrb[0].mxu0
    %2201 = vdwg.mxu0
    %2206 = vrot.lane.b32.xlu0 %v1789, 32
    %v2207 = vpop.permute.xlu0 %2206
    %2208 = vrot.lane.b32.xlu0 %v1794, 32
    %v2209 = vpop.permute.xlu0 %2208
    %2210 = vrot.lane.b32.xlu0 %v1870, 32
    %v2211 = vpop.permute.xlu0 %2210
    %2212 = vrot.lane.b32.xlu0 %v1875, 32
    %v2213 = vpop.permute.xlu0 %2212
    %2222 = vrot.lane.b32.xlu0 %v1951, 64
    %v2223 = vpop.permute.xlu0 %2222
    %2224 = vrot.lane.b32.xlu0 %v1956, 64
    %v2225 = vpop.permute.xlu0 %2224
    %2226 = vrot.lane.b32.xlu0 %v2032, 64
    %v2227 = vpop.permute.xlu0 %2226
    %2228 = vrot.lane.b32.xlu0 %v2037, 64
    %v2229 = vpop.permute.xlu0 %2228
    %2238 = vrot.lane.b32.xlu0 %v2113, 96
    %v2239 = vpop.permute.xlu0 %2238
    %2240 = vrot.lane.b32.xlu0 %v2118, 96
    %v2241 = vpop.permute.xlu0 %2240
    %2242 = vrot.lane.b32.xlu0 %v2194, 96
    %v2243 = vpop.permute.xlu0 %2242
    %2244 = vrot.lane.b32.xlu0 %v2199, 96
    %v2245 = vpop.permute.xlu0 %2244
    %v2250 = vsel %vm712, %v1627, %v2207
    %v2251 = vsel %vm712, %v1632, %v2209
    %v2252 = vsel %vm712, %v1708, %v2211
    %v2253 = vsel %vm712, %v1713, %v2213
    %vm2254 = vcmask 523264
    %v2255 = vsel %vm2254, %v2250, %v2223
    %v2256 = vsel %vm2254, %v2251, %v2225
    %v2257 = vsel %vm2254, %v2252, %v2227
    %v2258 = vsel %vm2254, %v2253, %v2229
    %vm2259 = vcmask 785408
    %v2260 = vsel %vm2259, %v2255, %v2239
    %v2261 = vsel %vm2259, %v2256, %v2241
    %v2262 = vsel %vm2259, %v2257, %v2243
    %v2263 = vsel %vm2259, %v2258, %v2245
    %v2264 = vld [vmem:[#allocation8] sm:$0xff]
    %v2265 = vld [vmem:[#allocation8 + $0x8] sm:$0xff]
    %v2266 = vld [vmem:[#allocation8 + $0x10] sm:$0xff]
    %v2267 = vld [vmem:[#allocation8 + $0x18] sm:$0xff]
    %v2268 = vld [vmem:[#allocation8 + $0x20] sm:$0xff]
    %v2269 = vld [vmem:[#allocation8 + $0x28] sm:$0xff]
    %v2270 = vld [vmem:[#allocation8 + $0x30] sm:$0xff]
    %v2271 = vld [vmem:[#allocation8 + $0x38] sm:$0xff]
    %v2272 = vld [vmem:[#allocation8 + $0x40] sm:$0xff]
    %v2273 = vld [vmem:[#allocation8 + $0x48] sm:$0xff]
    %v2274 = vld [vmem:[#allocation8 + $0x50] sm:$0xff]
    %v2275 = vld [vmem:[#allocation8 + $0x58] sm:$0xff]
    %v2276 = vld [vmem:[#allocation8 + $0x60] sm:$0xff]
    %v2277 = vld [vmem:[#allocation8 + $0x68] sm:$0xff]
    %v2278 = vld [vmem:[#allocation8 + $0x70] sm:$0xff]
    %v2279 = vld [vmem:[#allocation8 + $0x78] sm:$0xff]
    %v2280 = vld [vmem:[%s9] sm:$0x1]
    %v2282 = vlaneseq
    %v2283 = vshrl.u32 %v2282, 7
    %v2284 = vsub.s32 0, %v2283
    %v2285 = vrot.slane %v2280, %v2284
    %2287 = vmatprep.subr.mxu0 0.0
    %2288 = vmatpush1.msra.mxu0 %v2264
    %2289 = vmatprep.subr.mxu0 0.0
    %2290 = vmatpush1.msra.mxu0 %v2265
    %2291 = vmatprep.subr.mxu0 0.0
    %2292 = vmatpush1.msra.mxu0 %v2266
    %2293 = vmatprep.subr.mxu0 0.0
    %2294 = vmatpush1.msra.mxu0 %v2267
    %2295 = vmatprep.subr.mxu0 0.0
    %2296 = vmatpush1.msra.mxu0 %v2268
    %2297 = vmatprep.subr.mxu0 0.0
    %2298 = vmatpush1.msra.mxu0 %v2269
    %2299 = vmatprep.subr.mxu0 0.0
    %2300 = vmatpush1.msra.mxu0 %v2270
    %2301 = vmatprep.subr.mxu0 0.0
    %2302 = vmatpush1.msra.mxu0 %v2271
    %2303 = vmatprep.subr.mxu0 0.0
    %2304 = vmatpush1.msra.mxu0 %v2272
    %2305 = vmatprep.subr.mxu0 0.0
    %2306 = vmatpush1.msra.mxu0 %v2273
    %2307 = vmatprep.subr.mxu0 0.0
    %2308 = vmatpush1.msra.mxu0 %v2274
    %2309 = vmatprep.subr.mxu0 0.0
    %2310 = vmatpush1.msra.mxu0 %v2275
    %2311 = vmatprep.subr.mxu0 0.0
    %2312 = vmatpush1.msra.mxu0 %v2276
    %2313 = vmatprep.subr.mxu0 0.0
    %2314 = vmatpush1.msra.mxu0 %v2277
    %2315 = vmatprep.subr.mxu0 0.0
    %2316 = vmatpush1.msra.mxu0 %v2278
    %2317 = vmatprep.subr.mxu0 0.0
    %2318 = vmatpush1.msra.mxu0 %v2279
    %2319 = vmatprep.subr.mxu0 0.0
    %2320 = vmatpush1.msra.mxu0 0.0
    %2321 = vmatprep.subr.mxu0 0.0
    %2322 = vmatpush1.msra.mxu0 0.0
    %2323 = vmatprep.subr.mxu0 0.0
    %2324 = vmatpush1.msra.mxu0 0.0
    %2325 = vmatprep.subr.mxu0 0.0
    %2326 = vmatpush1.msra.mxu0 0.0
    %2327 = vmatprep.subr.mxu0 0.0
    %2328 = vmatpush1.msra.mxu0 0.0
    %2329 = vmatprep.subr.mxu0 0.0
    %2330 = vmatpush1.msra.mxu0 0.0
    %2331 = vmatprep.subr.mxu0 0.0
    %2332 = vmatpush1.msra.mxu0 0.0
    %2333 = vmatprep.subr.mxu0 0.0
    %2334 = vmatpush1.msra.mxu0 0.0
    %2335 = vmatprep.subr.mxu0 0.0
    %2336 = vmatpush1.msra.mxu0 0.0
    %2337 = vmatprep.subr.mxu0 0.0
    %2338 = vmatpush1.msra.mxu0 0.0
    %2339 = vmatprep.subr.mxu0 0.0
    %2340 = vmatpush1.msra.mxu0 0.0
    %2341 = vmatprep.subr.mxu0 0.0
    %2342 = vmatpush1.msra.mxu0 0.0
    %2343 = vmatprep.subr.mxu0 0.0
    %2344 = vmatpush1.msra.mxu0 0.0
    %2345 = vmatprep.subr.mxu0 0.0
    %2346 = vmatpush1.msra.mxu0 0.0
    %2347 = vmatprep.subr.mxu0 0.0
    %2348 = vmatpush1.msra.mxu0 0.0
    %2349 = vmatprep.subr.mxu0 0.0
    %2350 = vmatpush1.msra.mxu0 0.0
    %2351 = vmatprep.mubr.f32.mxu0 0.0
    %2352 = vmatmul.mubr.f32.gmra.mrb[0].mxu0 %v2260
    %v2353 = vpop.f32.mrb[0].mxu0
    %v2354 = vadd.f32 %v2285, %v2353
    %v2355 = vpop.f32.mrb[0].mxu0
    %2356 = vmatprep.mubr.f32.mxu0 0.0
    %2357 = vmatmul.mubr.f32.gmra.mrb[0].mxu0 %v2261
    %v2358 = vpop.f32.mrb[0].mxu0
    %v2359 = vadd.f32 %v2285, %v2358
    %v2360 = vpop.f32.mrb[0].mxu0
    %2361 = vmatprep.mubr.f32.mxu0 0.0
    %2362 = vmatmul.mubr.f32.gmra.mrb[0].mxu0 %v2262
    %v2363 = vpop.f32.mrb[0].mxu0
    %v2364 = vadd.f32 %v2285, %v2363
    %v2365 = vpop.f32.mrb[0].mxu0
    %2366 = vmatprep.mubr.f32.mxu0 0.0
    %2367 = vmatmul.mubr.f32.gmra.mrb[0].mxu0 %v2263
    %v2368 = vpop.f32.mrb[0].mxu0
    %v2369 = vadd.f32 %v2285, %v2368
    %v2370 = vpop.f32.mrb[0].mxu0
    %2371 = vdwg.mxu0
    %v2372 = vadd.f32 %v2354, %v132
    %v2373 = vadd.f32 %v2359, %v133
    %v2374 = vadd.f32 %v2364, %v134
    %v2375 = vadd.f32 %v2369, %v135
    %v2376 = vld [vmem:[#allocation10] sm:$0xff]
    %v2377 = vld [vmem:[#allocation10 + $0x8] sm:$0xff]
    %v2378 = vld [vmem:[#allocation10 + $0x10] sm:$0xff]
    %v2379 = vld [vmem:[#allocation10 + $0x18] sm:$0xff]
    %v2380 = vld [vmem:[#allocation10 + $0x20] sm:$0xff]
    %v2381 = vld [vmem:[#allocation10 + $0x28] sm:$0xff]
    %v2382 = vld [vmem:[#allocation10 + $0x30] sm:$0xff]
    %v2383 = vld [vmem:[#allocation10 + $0x38] sm:$0xff]
    %v2384 = vld [vmem:[#allocation10 + $0x40] sm:$0xff]
    %v2385 = vld [vmem:[#allocation10 + $0x48] sm:$0xff]
    %v2386 = vld [vmem:[#allocation10 + $0x50] sm:$0xff]
    %v2387 = vld [vmem:[#allocation10 + $0x58] sm:$0xff]
    %v2388 = vld [vmem:[#allocation10 + $0x60] sm:$0xff]
    %v2389 = vld [vmem:[#allocation10 + $0x68] sm:$0xff]
    %v2390 = vld [vmem:[#allocation10 + $0x70] sm:$0xff]
    %v2391 = vld [vmem:[#allocation10 + $0x78] sm:$0xff]
    %v2392 = vld [vmem:[%s11] sm:$0x1]
    %v2394 = vlaneseq
    %v2395 = vshrl.u32 %v2394, 7
    %v2396 = vsub.s32 0, %v2395
    %v2397 = vrot.slane %v2392, %v2396
    %2399 = vmatprep.subr.mxu0 0.0
    %2400 = vmatpush1.msra.mxu0 %v2376
    %2401 = vmatprep.subr.mxu0 0.0
    %2402 = vmatpush1.msra.mxu0 %v2377
    %2403 = vmatprep.subr.mxu0 0.0
    %2404 = vmatpush1.msra.mxu0 %v2378
    %2405 = vmatprep.subr.mxu0 0.0
    %2406 = vmatpush1.msra.mxu0 %v2379
    %2407 = vmatprep.subr.mxu0 0.0
    %2408 = vmatpush1.msra.mxu0 %v2380
    %2409 = vmatprep.subr.mxu0 0.0
    %2410 = vmatpush1.msra.mxu0 %v2381
    %2411 = vmatprep.subr.mxu0 0.0
    %2412 = vmatpush1.msra.mxu0 %v2382
    %2413 = vmatprep.subr.mxu0 0.0
    %2414 = vmatpush1.msra.mxu0 %v2383
    %2415 = vmatprep.subr.mxu0 0.0
    %2416 = vmatpush1.msra.mxu0 %v2384
    %2417 = vmatprep.subr.mxu0 0.0
    %2418 = vmatpush1.msra.mxu0 %v2385
    %2419 = vmatprep.subr.mxu0 0.0
    %2420 = vmatpush1.msra.mxu0 %v2386
    %2421 = vmatprep.subr.mxu0 0.0
    %2422 = vmatpush1.msra.mxu0 %v2387
    %2423 = vmatprep.subr.mxu0 0.0
    %2424 = vmatpush1.msra.mxu0 %v2388
    %2425 = vmatprep.subr.mxu0 0.0
    %2426 = vmatpush1.msra.mxu0 %v2389
    %2427 = vmatprep.subr.mxu0 0.0
    %2428 = vmatpush1.msra.mxu0 %v2390
    %2429 = vmatprep.subr.mxu0 0.0
    %2430 = vmatpush1.msra.mxu0 %v2391
    %2431 = vmatprep.subr.mxu0 0.0
    %2432 = vmatpush1.msra.mxu0 0.0
    %2433 = vmatprep.subr.mxu0 0.0
    %2434 = vmatpush1.msra.mxu0 0.0
    %2435 = vmatprep.subr.mxu0 0.0
    %2436 = vmatpush1.msra.mxu0 0.0
    %2437 = vmatprep.subr.mxu0 0.0
    %2438 = vmatpush1.msra.mxu0 0.0
    %2439 = vmatprep.subr.mxu0 0.0
    %2440 = vmatpush1.msra.mxu0 0.0
    %2441 = vmatprep.subr.mxu0 0.0
    %2442 = vmatpush1.msra.mxu0 0.0
    %2443 = vmatprep.subr.mxu0 0.0
    %2444 = vmatpush1.msra.mxu0 0.0
    %2445 = vmatprep.subr.mxu0 0.0
    %2446 = vmatpush1.msra.mxu0 0.0
    %2447 = vmatprep.subr.mxu0 0.0
    %2448 = vmatpush1.msra.mxu0 0.0
    %2449 = vmatprep.subr.mxu0 0.0
    %2450 = vmatpush1.msra.mxu0 0.0
    %2451 = vmatprep.subr.mxu0 0.0
    %2452 = vmatpush1.msra.mxu0 0.0
    %2453 = vmatprep.subr.mxu0 0.0
    %2454 = vmatpush1.msra.mxu0 0.0
    %2455 = vmatprep.subr.mxu0 0.0
    %2456 = vmatpush1.msra.mxu0 0.0
    %2457 = vmatprep.subr.mxu0 0.0
    %2458 = vmatpush1.msra.mxu0 0.0
    %2459 = vmatprep.subr.mxu0 0.0
    %2460 = vmatpush1.msra.mxu0 0.0
    %2461 = vmatprep.subr.mxu0 0.0
    %2462 = vmatpush1.msra.mxu0 0.0
    %2463 = vmatprep.mubr.f32.mxu0 0.0
    %2464 = vmatmul.mubr.f32.gmra.mrb[0].mxu0 %v2372
    %v2465 = vpop.f32.mrb[0].mxu0
    %v2466 = vadd.f32 %v2397, %v2465
    %v2467 = vpop.f32.mrb[0].mxu0
    %2468 = vmatprep.mubr.f32.mxu0 0.0
    %2469 = vmatmul.mubr.f32.gmra.mrb[0].mxu0 %v2373
    %v2470 = vpop.f32.mrb[0].mxu0
    %v2471 = vadd.f32 %v2397, %v2470
    %v2472 = vpop.f32.mrb[0].mxu0
    %2473 = vmatprep.mubr.f32.mxu0 0.0
    %2474 = vmatmul.mubr.f32.gmra.mrb[0].mxu0 %v2374
    %v2475 = vpop.f32.mrb[0].mxu0
    %v2476 = vadd.f32 %v2397, %v2475
    %v2477 = vpop.f32.mrb[0].mxu0
    %2478 = vmatprep.mubr.f32.mxu0 0.0
    %2479 = vmatmul.mubr.f32.gmra.mrb[0].mxu0 %v2375
    %v2480 = vpop.f32.mrb[0].mxu0
    %v2481 = vadd.f32 %v2397, %v2480
    %v2482 = vpop.f32.mrb[0].mxu0
    %2483 = vdwg.mxu0
    %v2484 = vmul.f32 %v2466, 0.5
    %v2485 = vmul.f32 %v2471, 0.5
    %v2486 = vmul.f32 %v2476, 0.5
    %v2487 = vmul.f32 %v2481, 0.5
    %v2488 = vmul.f32 %v2466, 0.044715
    %v2489 = vmul.f32 %v2471, 0.044715
    %v2490 = vmul.f32 %v2476, 0.044715
    %v2491 = vmul.f32 %v2481, 0.044715
    %v2492 = vmul.f32 %v2488, %v2466
    %v2493 = vmul.f32 %v2489, %v2471
    %v2494 = vmul.f32 %v2490, %v2476
    %v2495 = vmul.f32 %v2491, %v2481
    %v2496 = vmul.f32 %v2492, %v2466
    %v2497 = vmul.f32 %v2493, %v2471
    %v2498 = vmul.f32 %v2494, %v2476
    %v2499 = vmul.f32 %v2495, %v2481
    %v2500 = vadd.f32 %v2466, %v2496
    %v2501 = vadd.f32 %v2471, %v2497
    %v2502 = vadd.f32 %v2476, %v2498
    %v2503 = vadd.f32 %v2481, %v2499
    %v2504 = vmul.f32 %v2500, 0.7978846
    %v2505 = vmul.f32 %v2501, 0.7978846
    %v2506 = vmul.f32 %v2502, 0.7978846
    %v2507 = vmul.f32 %v2503, 0.7978846
    %v2508 = vtanh.pop %v2504
    %v2509 = vtanh.pop %v2505
    %v2510 = vtanh.pop %v2506
    %v2511 = vtanh.pop %v2507
    %v2512 = vadd.f32 %v2508, 1.0
    %v2513 = vadd.f32 %v2509, 1.0
    %v2514 = vadd.f32 %v2510, 1.0
    %v2515 = vadd.f32 %v2511, 1.0
    %v2516 = vmul.f32 %v2484, %v2512
    %v2517 = vmul.f32 %v2485, %v2513
    %v2518 = vmul.f32 %v2486, %v2514
    %v2519 = vmul.f32 %v2487, %v2515
    %v2520 = vld [vmem:[#allocation11] sm:$0xff]
    %v2521 = vld [vmem:[#allocation11 + $0x8] sm:$0xff]
    %v2522 = vld [vmem:[#allocation11 + $0x10] sm:$0xff]
    %v2523 = vld [vmem:[#allocation11 + $0x18] sm:$0xff]
    %v2524 = vld [vmem:[#allocation11 + $0x20] sm:$0xff]
    %v2525 = vld [vmem:[#allocation11 + $0x28] sm:$0xff]
    %v2526 = vld [vmem:[#allocation11 + $0x30] sm:$0xff]
    %v2527 = vld [vmem:[#allocation11 + $0x38] sm:$0xff]
    %v2528 = vld [vmem:[#allocation11 + $0x40] sm:$0xff]
    %v2529 = vld [vmem:[#allocation11 + $0x48] sm:$0xff]
    %v2530 = vld [vmem:[#allocation11 + $0x50] sm:$0xff]
    %v2531 = vld [vmem:[#allocation11 + $0x58] sm:$0xff]
    %v2532 = vld [vmem:[#allocation11 + $0x60] sm:$0xff]
    %v2533 = vld [vmem:[#allocation11 + $0x68] sm:$0xff]
    %v2534 = vld [vmem:[#allocation11 + $0x70] sm:$0xff]
    %v2535 = vld [vmem:[#allocation11 + $0x78] sm:$0xff]
    %v2536 = vld [vmem:[%s13] sm:$0x1]
    %v2538 = vlaneseq
    %v2539 = vshrl.u32 %v2538, 7
    %v2540 = vsub.s32 0, %v2539
    %v2541 = vrot.slane %v2536, %v2540
    %2543 = vmatprep.subr.mxu0 0.0
    %2544 = vmatpush1.msra.mxu0 %v2520
    %2545 = vmatprep.subr.mxu0 0.0
    %2546 = vmatpush1.msra.mxu0 %v2521
    %2547 = vmatprep.subr.mxu0 0.0
    %2548 = vmatpush1.msra.mxu0 %v2522
    %2549 = vmatprep.subr.mxu0 0.0
    %2550 = vmatpush1.msra.mxu0 %v2523
    %2551 = vmatprep.subr.mxu0 0.0
    %2552 = vmatpush1.msra.mxu0 %v2524
    %2553 = vmatprep.subr.mxu0 0.0
    %2554 = vmatpush1.msra.mxu0 %v2525
    %2555 = vmatprep.subr.mxu0 0.0
    %2556 = vmatpush1.msra.mxu0 %v2526
    %2557 = vmatprep.subr.mxu0 0.0
    %2558 = vmatpush1.msra.mxu0 %v2527
    %2559 = vmatprep.subr.mxu0 0.0
    %2560 = vmatpush1.msra.mxu0 %v2528
    %2561 = vmatprep.subr.mxu0 0.0
    %2562 = vmatpush1.msra.mxu0 %v2529
    %2563 = vmatprep.subr.mxu0 0.0
    %2564 = vmatpush1.msra.mxu0 %v2530
    %2565 = vmatprep.subr.mxu0 0.0
    %2566 = vmatpush1.msra.mxu0 %v2531
    %2567 = vmatprep.subr.mxu0 0.0
    %2568 = vmatpush1.msra.mxu0 %v2532
    %2569 = vmatprep.subr.mxu0 0.0
    %2570 = vmatpush1.msra.mxu0 %v2533
    %2571 = vmatprep.subr.mxu0 0.0
    %2572 = vmatpush1.msra.mxu0 %v2534
    %2573 = vmatprep.subr.mxu0 0.0
    %2574 = vmatpush1.msra.mxu0 %v2535
    %2575 = vmatprep.subr.mxu0 0.0
    %2576 = vmatpush1.msra.mxu0 0.0
    %2577 = vmatprep.subr.mxu0 0.0
    %2578 = vmatpush1.msra.mxu0 0.0
    %2579 = vmatprep.subr.mxu0 0.0
    %2580 = vmatpush1.msra.mxu0 0.0
    %2581 = vmatprep.subr.mxu0 0.0
    %2582 = vmatpush1.msra.mxu0 0.0
    %2583 = vmatprep.subr.mxu0 0.0
    %2584 = vmatpush1.msra.mxu0 0.0
    %2585 = vmatprep.subr.mxu0 0.0
    %2586 = vmatpush1.msra.mxu0 0.0
    %2587 = vmatprep.subr.mxu0 0.0
    %2588 = vmatpush1.msra.mxu0 0.0
    %2589 = vmatprep.subr.mxu0 0.0
    %2590 = vmatpush1.msra.mxu0 0.0
    %2591 = vmatprep.subr.mxu0 0.0
    %2592 = vmatpush1.msra.mxu0 0.0
    %2593 = vmatprep.subr.mxu0 0.0
    %2594 = vmatpush1.msra.mxu0 0.0
    %2595 = vmatprep.subr.mxu0 0.0
    %2596 = vmatpush1.msra.mxu0 0.0
    %2597 = vmatprep.subr.mxu0 0.0
    %2598 = vmatpush1.msra.mxu0 0.0
    %2599 = vmatprep.subr.mxu0 0.0
    %2600 = vmatpush1.msra.mxu0 0.0
    %2601 = vmatprep.subr.mxu0 0.0
    %2602 = vmatpush1.msra.mxu0 0.0
    %2603 = vmatprep.subr.mxu0 0.0
    %2604 = vmatpush1.msra.mxu0 0.0
    %2605 = vmatprep.subr.mxu0 0.0
    %2606 = vmatpush1.msra.mxu0 0.0
    %2607 = vmatprep.mubr.f32.mxu0 0.0
    %2608 = vmatmul.mubr.f32.gmra.mrb[0].mxu0 %v2516
    %v2609 = vpop.f32.mrb[0].mxu0
    %v2610 = vadd.f32 %v2541, %v2609
    %v2611 = vpop.f32.mrb[0].mxu0
    %2612 = vmatprep.mubr.f32.mxu0 0.0
    %2613 = vmatmul.mubr.f32.gmra.mrb[0].mxu0 %v2517
    %v2614 = vpop.f32.mrb[0].mxu0
    %v2615 = vadd.f32 %v2541, %v2614
    %v2616 = vpop.f32.mrb[0].mxu0
    %2617 = vmatprep.mubr.f32.mxu0 0.0
    %2618 = vmatmul.mubr.f32.gmra.mrb[0].mxu0 %v2518
    %v2619 = vpop.f32.mrb[0].mxu0
    %v2620 = vadd.f32 %v2541, %v2619
    %v2621 = vpop.f32.mrb[0].mxu0
    %2622 = vmatprep.mubr.f32.mxu0 0.0
    %2623 = vmatmul.mubr.f32.gmra.mrb[0].mxu0 %v2519
    %v2624 = vpop.f32.mrb[0].mxu0
    %v2625 = vadd.f32 %v2541, %v2624
    %v2626 = vpop.f32.mrb[0].mxu0
    %2627 = vdwg.mxu0
    %v2628 = vadd.f32 %v2610, %v2372
    %v2629 = vadd.f32 %v2615, %v2373
    %v2630 = vadd.f32 %v2620, %v2374
    %v2631 = vadd.f32 %v2625, %v2375
    %2632 = vst [vmem:[#allocation13] sm:$0xff] %v2628
    %2633 = vst [vmem:[#allocation13 + $0x8] sm:$0xff] %v2629
    %2634 = vst [vmem:[#allocation13 + $0x10] sm:$0xff] %v2630
    %2635 = vst [vmem:[#allocation13 + $0x18] sm:$0xff] %v2631
    // Predicated region
    $region82: #{transformer_qkv.1} parent=1 // pred_check
      _
    $region83: #{transformer_qkv.1} parent=1 // pred_check_branch
      %2637 = sbr.rel (0) target = $region85
    $region84: #{transformer_qkv.1} parent=1 // pred_region
      %s2639 = ssub.s32 512, 512
      %2640 = vsyncadd [#allocation4], %s2639
      %s2641 = sshll.u32 [#allocation13], 4
      %s2642 = int_to_ptr.vmem [resolvable:$true] %s2641
      %2647 = dma.vmem_to_hbm [thread:$0]  %s2642, 512, %s14, [#allocation4], 128, 128, 8
    $region85: #{transformer_qkv.1} parent=1 // pred_fallthru
      _
    // Predicated region
    $region86: #{transformer_qkv.1} parent=1 // pred_check
      _
    $region87: #{transformer_qkv.1} parent=1 // pred_check_branch
      %2649 = sbr.rel (0) target = $region89
    $region88: #{transformer_qkv.1} parent=1 // pred_region
      %2650 = dma.done [#allocation4], 512
    $region89: #{transformer_qkv.1} parent=1 // pred_fallthru
      _
    %2651 = vsyncpa [#allocation3], 1
    %2652 = vsyncpa [#allocation6], 1
    %2653 = vsyncpa [#allocation9], 1
    %2654 = vsyncpa [#allocation12], 1
    %2655 = vsyncpa [#allocation4], 1

</llo_original>
